<compile_context>
chip_gen: v7x
topology: tpu7x:2x2x1
jax: 0.10.0
libtpu: 0.0.40
codegen_flags: <defaults>
</compile_context>

<pallas_src>
import functools

import jax
import jax.numpy as jnp
from jax.experimental import pallas as pl
from jax.experimental.pallas import tpu as pltpu

LN_EPS = 1e-5
BN_EPS = 1e-5


def _arm_kernel(fj_ref, sub_ref, scene_ref, w_ref, vec_ref, out_ref, *,
                scale, mm_dtype):
    B, S, C = fj_ref.shape
    _, K, _ = sub_ref.shape
    BS, BK = B * S, B * K
    f32 = jnp.float32

    # ---- packed parameters (static slices of the two slabs) ------------------
    # w_ref: [C, 7C] = [wq | wsk | wsv | wek | wev | wf1 | wf2]
    wq = w_ref[:, 0 * C:1 * C].astype(mm_dtype)        # [C, C]
    wskv = w_ref[:, 1 * C:3 * C].astype(mm_dtype)      # [C, 2C]  (key | value)
    wekv = w_ref[:, 3 * C:5 * C].astype(mm_dtype)      # [C, 2C]
    wf1 = w_ref[:, 5 * C:6 * C].astype(mm_dtype)       # [C, C]
    wf2 = w_ref[:, 6 * C:7 * C].astype(mm_dtype)       # [C, C]

    # vec_ref: [10, C] rows = bq, bsk, bsv, bek, bev, ln_g, ln_b, bf, bn_g, bn_b
    bq, bsk, bsv, bek, bev = (vec_ref[i:i + 1, :] for i in range(5))
    ln_g, ln_b = vec_ref[5:6, :], vec_ref[6:7, :]
    bf = vec_ref[7:8, :]
    bn_g, bn_b = vec_ref[8:9, :], vec_ref[9:10, :]

    # ---- flatten batch into the matmul M dim ----------------------------------
    obj2 = fj_ref[...].reshape(BS, C)                  # [B*S, C]
    sub2 = sub_ref[...].reshape(BK, C)                 # [B*K, C]
    scene2 = scene_ref[...].reshape(BK, C)

    def mm(x, w):
        return jnp.dot(x.astype(mm_dtype), w, preferred_element_type=f32)

    # q projection; fold the 1/sqrt(P) softmax scale into q once.
    q2 = (mm(obj2, wq) + bq) * scale                   # [B*S, C]

    # fused key/value projections: one matmul per branch instead of two.
    skv = mm(sub2, wskv)                               # [B*K, 2C]
    ekv = mm(scene2, wekv)                             # [B*K, 2C]

    s_key = (skv[:, :C] + bsk).reshape(B, K, C)
    s_val = (skv[:, C:] + bsv).reshape(B, K, C)
    e_key = (ekv[:, :C] + bek).reshape(B, K, C)
    e_val = (ekv[:, C:] + bev).reshape(B, K, C)

    q3 = q2.reshape(B, S, C).astype(mm_dtype)

    def attend(key, val):
        logits = jnp.einsum('bsp,bkp->bsk', q3, key.astype(mm_dtype),
                            preferred_element_type=f32)      # [B, S, K]
        m = jnp.max(logits, axis=-1, keepdims=True)
        e = jnp.exp(logits - m)
        denom = jnp.sum(e, axis=-1, keepdims=True)
        p = e * pl.reciprocal(denom, approx=True)            # EUP, frees VALU slots
        return jnp.einsum('bsk,bkp->bsp', p.astype(mm_dtype), val.astype(mm_dtype),
                          preferred_element_type=f32)        # [B, S, C]

    I1 = attend(s_key, s_val).reshape(BS, C)
    I2 = attend(e_key, e_val).reshape(BS, C)

    def layernorm(x):                                  # per-row over channels, f32
        mu = jnp.mean(x, axis=-1, keepdims=True)
        var = jnp.mean((x - mu) ** 2, axis=-1, keepdims=True)
        return (x - mu) * jax.lax.rsqrt(var + LN_EPS) * ln_g + ln_b

    theta1 = layernorm(obj2 + I1)                      # [B*S, C]
    theta2 = layernorm(obj2 + I2)

    # Conv1d(2C, C, 1) on cat(theta1, theta2) along channels: split-weight form,
    # no lane-axis concat and no [B,S,2C] intermediate.
    z = mm(theta1, wf1) + mm(theta2, wf2) + bf         # [B*S, C]

    # BatchNorm1d (training mode): per-channel stats over all (B, S) positions.
    mu = jnp.mean(z, axis=0, keepdims=True)
    var = jnp.mean((z - mu) ** 2, axis=0, keepdims=True)
    zn = (z - mu) * jax.lax.rsqrt(var + BN_EPS) * bn_g + bn_b

    out_ref[...] = jnp.maximum(zn, 0.0).reshape(B, S, C)


def pack_params(p):
    """Pack 16 small parameter arrays into 2 slabs (fewer DMAs, no per-array tile pad)."""
    w_slab = jnp.concatenate(
        [p['wq'], p['wsk'], p['wsv'], p['wek'], p['wev'], p['wf1'], p['wf2']],
        axis=1)                                                     # [C, 7C]
    vec_slab = jnp.concatenate(
        [p['bq'], p['bsk'], p['bsv'], p['bek'], p['bev'],
         p['ln_g'], p['ln_b'], p['bf'], p['bn_g'], p['bn_b']],
        axis=0)                                                     # [10, C]
    return w_slab, vec_slab


def affordance_revealed_module(F_j, F_s, F_e, params, *, matmul_dtype=jnp.bfloat16):
    """matmul_dtype=jnp.float32 gives bit-faithful f32 matmuls; bf16 (default) uses the
    MXU-native path with f32 accumulation (recommended on v6e/v7x)."""
    B, S, C = F_j.shape
    _, H, W, _ = F_s.shape
    HW = H * W

    P = params['wq'].shape[1]
    assert P == C, "obj + I requires proj_dim == emb_dim (as in the PyTorch module)"
    scale = float(P) ** (-0.5)

    # PyTorch: F_s.view(B, C, -1).mT — raw memory reinterpretation, then transpose.
    # TODO(synk): the PyTorch docstring says F_s is [B,H,W,C] while view(B,C,-1) implies a
    # [B,C,H,W]-contiguous tensor; we reproduce the literal code on the stated layout. If the
    # real checkpoint feeds channel-first features, pass them here already as [B, C, HW].
    sub = jnp.reshape(F_s, (B, C, HW)).transpose(0, 2, 1)     # [B, HW, C]
    scene = jnp.reshape(F_e, (B, C, HW)).transpose(0, 2, 1)   # [B, HW, C]

    w_slab, vec_slab = pack_params(params)

    # Explicit scoped-VMEM budget for the monolithic (no-grid) call: size it from the
    # actual resident footprint with generous headroom, capped at v7x physical VMEM.
    elems = 2 * B * S * C + 2 * B * HW * C + w_slab.size + vec_slab.size      # I/O
    elems += 8 * B * S * C + 6 * B * HW * C + 4 * B * S * HW                  # intermediates
    vmem_limit = int(min(64 * 2**20, max(32 * 2**20, 8 * 4 * elems)))

    # TODO(synk): for production IAGNet sizes (C>=256, S in the hundreds) tile over (B, S)
    # with a grid + dimension_semantics=("parallel", ...) (v7x megacore) and turn BatchNorm
    # into a two-pass reduction; at these shapes a single VMEM-resident call is fastest.
    kernel = functools.partial(_arm_kernel, scale=scale, mm_dtype=matmul_dtype)
    vmem = pl.BlockSpec(memory_space=pltpu.MemorySpace.VMEM)
    return pl.pallas_call(
        kernel,
        out_shape=jax.ShapeDtypeStruct((B, S, C), jnp.float32),
        in_specs=[vmem] * 5,
        out_specs=vmem,
        compiler_params=pltpu.CompilerParams(vmem_limit_bytes=vmem_limit),
    )(F_j, sub, scene, w_slab, vec_slab)


def init_params(key, emb_dim, proj_dim):
    """Deterministic synthetic parameters matching the nn.Module shapes.
    Linear weights are stored pre-transposed as [in, out]; the Conv1d(2C, C, 1) weight is
    stored pre-split as wf1 (theta1 channels) and wf2 (theta2 channels), each [C, C]."""
    ks = jax.random.split(key, 13)

    def w(k, shape):
        return jax.random.normal(k, shape, jnp.float32) * 0.05

    C, Pd = emb_dim, proj_dim
    return dict(
        wq=w(ks[0], (C, Pd)), bq=w(ks[1], (1, Pd)),
        wsk=w(ks[2], (C, Pd)), bsk=w(ks[3], (1, Pd)),
        wsv=w(ks[4], (C, Pd)), bsv=w(ks[5], (1, Pd)),
        wek=w(ks[6], (C, Pd)), bek=w(ks[7], (1, Pd)),
        wev=w(ks[8], (C, Pd)), bev=w(ks[9], (1, Pd)),
        ln_g=jnp.ones((1, C), jnp.float32),
        ln_b=jnp.zeros((1, C), jnp.float32),
        wf1=w(ks[10], (C, C)), wf2=w(ks[11], (C, C)),
        bf=w(ks[12], (1, C)),
        bn_g=jnp.ones((1, C), jnp.float32),
        bn_b=jnp.zeros((1, C), jnp.float32),
    )


if __name__ == "__main__":
    key = jax.random.PRNGKey(0)
    B = 2
    emb_dim = 32          # C
    proj_dim = 32         # must equal emb_dim for obj + I_1 to be valid (as in PyTorch)
    H = W = 4
    N_p = 8
    S = N_p + H * W       # N_p + N_i = 24

    k1, k2, k3, k4 = jax.random.split(key, 4)
    F_j = jax.random.normal(k1, (B, S, emb_dim), jnp.float32)
    F_s = jax.random.normal(k2, (B, H, W, emb_dim), jnp.float32)
    F_e = jax.random.normal(k3, (B, H, W, emb_dim), jnp.float32)
    params = init_params(k4, emb_dim, proj_dim)

    out = affordance_revealed_module(F_j, F_s, F_e, params)
    jax.block_until_ready(out)
    assert out.shape == (B, S, emb_dim), out.shape
    print("KERNEL_OK")
</pallas_src>

<mosaic_0001>
module attributes {stable_mosaic.version = 11 : i64} {
  func.func @_arm_kernel(%arg0: memref<2x24x32xf32, #tpu.memory_space<vmem>>, %arg1: memref<2x16x32xf32, #tpu.memory_space<vmem>>, %arg2: memref<2x16x32xf32, #tpu.memory_space<vmem>>, %arg3: memref<32x224xf32, #tpu.memory_space<vmem>>, %arg4: memref<10x32xf32, #tpu.memory_space<vmem>>, %arg5: memref<2x24x32xf32, #tpu.memory_space<vmem>>) attributes {dimension_semantics = [], scalar_prefetch = 0 : i64, scratch_operands = 0 : i64, tpu.core_type = #tpu.core_type<tc>} {
    %c0 = arith.constant 0 : index
    %c0_0 = arith.constant 0 : index
    %0 = vector.load %arg3[%c0, %c0_0] : memref<32x224xf32, #tpu.memory_space<vmem>>, vector<32x32xf32>
    %1 = arith.truncf %0 : vector<32x32xf32> to vector<32x32xbf16>
    %c0_1 = arith.constant 0 : index
    %c32 = arith.constant 32 : index
    %2 = vector.load %arg3[%c0_1, %c32] : memref<32x224xf32, #tpu.memory_space<vmem>>, vector<32x64xf32>
    %3 = arith.truncf %2 : vector<32x64xf32> to vector<32x64xbf16>
    %c0_2 = arith.constant 0 : index
    %c96 = arith.constant 96 : index
    %4 = vector.load %arg3[%c0_2, %c96] : memref<32x224xf32, #tpu.memory_space<vmem>>, vector<32x64xf32>
    %5 = arith.truncf %4 : vector<32x64xf32> to vector<32x64xbf16>
    %c0_3 = arith.constant 0 : index
    %c160 = arith.constant 160 : index
    %6 = vector.load %arg3[%c0_3, %c160] : memref<32x224xf32, #tpu.memory_space<vmem>>, vector<32x32xf32>
    %7 = arith.truncf %6 : vector<32x32xf32> to vector<32x32xbf16>
    %c0_4 = arith.constant 0 : index
    %c192 = arith.constant 192 : index
    %8 = vector.load %arg3[%c0_4, %c192] : memref<32x224xf32, #tpu.memory_space<vmem>>, vector<32x32xf32>
    %9 = arith.truncf %8 : vector<32x32xf32> to vector<32x32xbf16>
    %c0_5 = arith.constant 0 : index
    %c0_6 = arith.constant 0 : index
    %10 = vector.load %arg4[%c0_5, %c0_6] : memref<10x32xf32, #tpu.memory_space<vmem>>, vector<1x32xf32>
    %c1 = arith.constant 1 : index
    %c0_7 = arith.constant 0 : index
    %11 = vector.load %arg4[%c1, %c0_7] : memref<10x32xf32, #tpu.memory_space<vmem>>, vector<1x32xf32>
    %c2 = arith.constant 2 : index
    %c0_8 = arith.constant 0 : index
    %12 = vector.load %arg4[%c2, %c0_8] : memref<10x32xf32, #tpu.memory_space<vmem>>, vector<1x32xf32>
    %c3 = arith.constant 3 : index
    %c0_9 = arith.constant 0 : index
    %13 = vector.load %arg4[%c3, %c0_9] : memref<10x32xf32, #tpu.memory_space<vmem>>, vector<1x32xf32>
    %c4 = arith.constant 4 : index
    %c0_10 = arith.constant 0 : index
    %14 = vector.load %arg4[%c4, %c0_10] : memref<10x32xf32, #tpu.memory_space<vmem>>, vector<1x32xf32>
    %c5 = arith.constant 5 : index
    %c0_11 = arith.constant 0 : index
    %15 = vector.load %arg4[%c5, %c0_11] : memref<10x32xf32, #tpu.memory_space<vmem>>, vector<1x32xf32>
    %c6 = arith.constant 6 : index
    %c0_12 = arith.constant 0 : index
    %16 = vector.load %arg4[%c6, %c0_12] : memref<10x32xf32, #tpu.memory_space<vmem>>, vector<1x32xf32>
    %c7 = arith.constant 7 : index
    %c0_13 = arith.constant 0 : index
    %17 = vector.load %arg4[%c7, %c0_13] : memref<10x32xf32, #tpu.memory_space<vmem>>, vector<1x32xf32>
    %c8 = arith.constant 8 : index
    %c0_14 = arith.constant 0 : index
    %18 = vector.load %arg4[%c8, %c0_14] : memref<10x32xf32, #tpu.memory_space<vmem>>, vector<1x32xf32>
    %c9 = arith.constant 9 : index
    %c0_15 = arith.constant 0 : index
    %19 = vector.load %arg4[%c9, %c0_15] : memref<10x32xf32, #tpu.memory_space<vmem>>, vector<1x32xf32>
    %c0_16 = arith.constant 0 : index
    %c0_17 = arith.constant 0 : index
    %c0_18 = arith.constant 0 : index
    %20 = vector.load %arg0[%c0_16, %c0_17, %c0_18] : memref<2x24x32xf32, #tpu.memory_space<vmem>>, vector<2x24x32xf32>
    %21 = vector.shape_cast %20 : vector<2x24x32xf32> to vector<48x32xf32>
    %c0_19 = arith.constant 0 : index
    %c0_20 = arith.constant 0 : index
    %c0_21 = arith.constant 0 : index
    %22 = vector.load %arg1[%c0_19, %c0_20, %c0_21] : memref<2x16x32xf32, #tpu.memory_space<vmem>>, vector<2x16x32xf32>
    %23 = vector.shape_cast %22 : vector<2x16x32xf32> to vector<32x32xf32>
    %c0_22 = arith.constant 0 : index
    %c0_23 = arith.constant 0 : index
    %c0_24 = arith.constant 0 : index
    %24 = vector.load %arg2[%c0_22, %c0_23, %c0_24] : memref<2x16x32xf32, #tpu.memory_space<vmem>>, vector<2x16x32xf32>
    %25 = vector.shape_cast %24 : vector<2x16x32xf32> to vector<32x32xf32>
    %26 = arith.truncf %21 : vector<48x32xf32> to vector<48x32xbf16>
    %cst = arith.constant dense<0.000000e+00> : vector<48x32xf32>
    %27 = tpu.matmul %26, %1, %cst {dimension_numbers = #tpu.dot_dimension_numbers<[1], [0], [0], [1], [0, 0, 1, 1], [], []>} : vector<48x32xbf16>, vector<32x32xbf16>, vector<48x32xf32> -> vector<48x32xf32>
    %28 = vector.broadcast %10 : vector<1x32xf32> to vector<48x32xf32>
    %29 = arith.addf %27, %28 : vector<48x32xf32>
    %cst_25 = arith.constant 0.176776692 : f32
    %30 = vector.broadcast %cst_25 : f32 to vector<48x32xf32>
    %31 = arith.mulf %29, %30 : vector<48x32xf32>
    %32 = arith.truncf %23 : vector<32x32xf32> to vector<32x32xbf16>
    %cst_26 = arith.constant dense<0.000000e+00> : vector<32x64xf32>
    %33 = tpu.matmul %32, %3, %cst_26 {dimension_numbers = #tpu.dot_dimension_numbers<[1], [0], [0], [1], [0, 0, 1, 1], [], []>} : vector<32x32xbf16>, vector<32x64xbf16>, vector<32x64xf32> -> vector<32x64xf32>
    %34 = arith.truncf %25 : vector<32x32xf32> to vector<32x32xbf16>
    %cst_27 = arith.constant dense<0.000000e+00> : vector<32x64xf32>
    %35 = tpu.matmul %34, %5, %cst_27 {dimension_numbers = #tpu.dot_dimension_numbers<[1], [0], [0], [1], [0, 0, 1, 1], [], []>} : vector<32x32xbf16>, vector<32x64xbf16>, vector<32x64xf32> -> vector<32x64xf32>
    %36 = vector.extract_strided_slice %33 {offsets = [0, 0], sizes = [32, 32], strides = [1, 1]} : vector<32x64xf32> to vector<32x32xf32>
    %37 = vector.broadcast %11 : vector<1x32xf32> to vector<32x32xf32>
    %38 = arith.addf %36, %37 : vector<32x32xf32>
    %39 = vector.shape_cast %38 : vector<32x32xf32> to vector<2x16x32xf32>
    %40 = vector.extract_strided_slice %33 {offsets = [0, 32], sizes = [32, 32], strides = [1, 1]} : vector<32x64xf32> to vector<32x32xf32>
    %41 = vector.broadcast %12 : vector<1x32xf32> to vector<32x32xf32>
    %42 = arith.addf %40, %41 : vector<32x32xf32>
    %43 = vector.shape_cast %42 : vector<32x32xf32> to vector<2x16x32xf32>
    %44 = vector.extract_strided_slice %35 {offsets = [0, 0], sizes = [32, 32], strides = [1, 1]} : vector<32x64xf32> to vector<32x32xf32>
    %45 = vector.broadcast %13 : vector<1x32xf32> to vector<32x32xf32>
    %46 = arith.addf %44, %45 : vector<32x32xf32>
    %47 = vector.shape_cast %46 : vector<32x32xf32> to vector<2x16x32xf32>
    %48 = vector.extract_strided_slice %35 {offsets = [0, 32], sizes = [32, 32], strides = [1, 1]} : vector<32x64xf32> to vector<32x32xf32>
    %49 = vector.broadcast %14 : vector<1x32xf32> to vector<32x32xf32>
    %50 = arith.addf %48, %49 : vector<32x32xf32>
    %51 = vector.shape_cast %50 : vector<32x32xf32> to vector<2x16x32xf32>
    %52 = vector.shape_cast %31 : vector<48x32xf32> to vector<2x24x32xf32>
    %53 = arith.truncf %52 : vector<2x24x32xf32> to vector<2x24x32xbf16>
    %54 = arith.truncf %39 : vector<2x16x32xf32> to vector<2x16x32xbf16>
    "tpu.trace_start"() <{level = 10 : i32, message = "bsp,bkp->bsk"}> : () -> ()
    %cst_28 = arith.constant dense<0.000000e+00> : vector<2x24x16xf32>
    %55 = tpu.matmul %53, %54, %cst_28 {dimension_numbers = #tpu.dot_dimension_numbers<[2], [2], [1], [1], [0, 0, 0, 1, 1, 1], [0], [0]>} : vector<2x24x32xbf16>, vector<2x16x32xbf16>, vector<2x24x16xf32> -> vector<2x24x16xf32>
    "tpu.trace_stop"() : () -> ()
    %cst_29 = arith.constant dense<0xFF800000> : vector<2x24xf32>
    %56 = vector.multi_reduction <maximumf>, %55, %cst_29 [2] : vector<2x24x16xf32> to vector<2x24xf32>
    %57 = vector.shape_cast %56 : vector<2x24xf32> to vector<2x24x1xf32>
    %58 = vector.broadcast %57 : vector<2x24x1xf32> to vector<2x24x16xf32>
    %59 = arith.subf %55, %58 : vector<2x24x16xf32>
    %60 = math.exp %59 : vector<2x24x16xf32>
    %cst_30 = arith.constant dense<0.000000e+00> : vector<2x24xf32>
    %61 = vector.multi_reduction <add>, %60, %cst_30 [2] : vector<2x24x16xf32> to vector<2x24xf32>
    %62 = vector.shape_cast %61 : vector<2x24xf32> to vector<2x24x1xf32>
    %63 = tpu.reciprocal %62 {approx = true} : vector<2x24x1xf32> -> vector<2x24x1xf32>
    %64 = vector.broadcast %63 : vector<2x24x1xf32> to vector<2x24x16xf32>
    %65 = arith.mulf %60, %64 : vector<2x24x16xf32>
    %66 = arith.truncf %65 : vector<2x24x16xf32> to vector<2x24x16xbf16>
    %67 = arith.truncf %43 : vector<2x16x32xf32> to vector<2x16x32xbf16>
    "tpu.trace_start"() <{level = 10 : i32, message = "bsk,bkp->bsp"}> : () -> ()
    %cst_31 = arith.constant dense<0.000000e+00> : vector<2x24x32xf32>
    %68 = tpu.matmul %66, %67, %cst_31 {dimension_numbers = #tpu.dot_dimension_numbers<[2], [1], [1], [2], [0, 0, 0, 1, 1, 2], [0], [0]>} : vector<2x24x16xbf16>, vector<2x16x32xbf16>, vector<2x24x32xf32> -> vector<2x24x32xf32>
    "tpu.trace_stop"() : () -> ()
    %69 = vector.shape_cast %68 : vector<2x24x32xf32> to vector<48x32xf32>
    %70 = arith.truncf %47 : vector<2x16x32xf32> to vector<2x16x32xbf16>
    "tpu.trace_start"() <{level = 10 : i32, message = "bsp,bkp->bsk"}> : () -> ()
    %cst_32 = arith.constant dense<0.000000e+00> : vector<2x24x16xf32>
    %71 = tpu.matmul %53, %70, %cst_32 {dimension_numbers = #tpu.dot_dimension_numbers<[2], [2], [1], [1], [0, 0, 0, 1, 1, 1], [0], [0]>} : vector<2x24x32xbf16>, vector<2x16x32xbf16>, vector<2x24x16xf32> -> vector<2x24x16xf32>
    "tpu.trace_stop"() : () -> ()
    %cst_33 = arith.constant dense<0xFF800000> : vector<2x24xf32>
    %72 = vector.multi_reduction <maximumf>, %71, %cst_33 [2] : vector<2x24x16xf32> to vector<2x24xf32>
    %73 = vector.shape_cast %72 : vector<2x24xf32> to vector<2x24x1xf32>
    %74 = vector.broadcast %73 : vector<2x24x1xf32> to vector<2x24x16xf32>
    %75 = arith.subf %71, %74 : vector<2x24x16xf32>
    %76 = math.exp %75 : vector<2x24x16xf32>
    %cst_34 = arith.constant dense<0.000000e+00> : vector<2x24xf32>
    %77 = vector.multi_reduction <add>, %76, %cst_34 [2] : vector<2x24x16xf32> to vector<2x24xf32>
    %78 = vector.shape_cast %77 : vector<2x24xf32> to vector<2x24x1xf32>
    %79 = tpu.reciprocal %78 {approx = true} : vector<2x24x1xf32> -> vector<2x24x1xf32>
    %80 = vector.broadcast %79 : vector<2x24x1xf32> to vector<2x24x16xf32>
    %81 = arith.mulf %76, %80 : vector<2x24x16xf32>
    %82 = arith.truncf %81 : vector<2x24x16xf32> to vector<2x24x16xbf16>
    %83 = arith.truncf %51 : vector<2x16x32xf32> to vector<2x16x32xbf16>
    "tpu.trace_start"() <{level = 10 : i32, message = "bsk,bkp->bsp"}> : () -> ()
    %cst_35 = arith.constant dense<0.000000e+00> : vector<2x24x32xf32>
    %84 = tpu.matmul %82, %83, %cst_35 {dimension_numbers = #tpu.dot_dimension_numbers<[2], [1], [1], [2], [0, 0, 0, 1, 1, 2], [0], [0]>} : vector<2x24x16xbf16>, vector<2x16x32xbf16>, vector<2x24x32xf32> -> vector<2x24x32xf32>
    "tpu.trace_stop"() : () -> ()
    %85 = vector.shape_cast %84 : vector<2x24x32xf32> to vector<48x32xf32>
    %86 = arith.addf %21, %69 : vector<48x32xf32>
    %cst_36 = arith.constant dense<0.000000e+00> : vector<48xf32>
    %87 = vector.multi_reduction <add>, %86, %cst_36 [1] : vector<48x32xf32> to vector<48xf32>
    %88 = vector.shape_cast %87 : vector<48xf32> to vector<48x1xf32>
    %cst_37 = arith.constant 3.200000e+01 : f32
    %89 = vector.broadcast %cst_37 : f32 to vector<48x1xf32>
    %90 = arith.divf %88, %89 : vector<48x1xf32>
    %91 = vector.broadcast %90 : vector<48x1xf32> to vector<48x32xf32>
    %92 = arith.subf %86, %91 : vector<48x32xf32>
    %93 = arith.mulf %92, %92 : vector<48x32xf32>
    %cst_38 = arith.constant dense<0.000000e+00> : vector<48xf32>
    %94 = vector.multi_reduction <add>, %93, %cst_38 [1] : vector<48x32xf32> to vector<48xf32>
    %95 = vector.shape_cast %94 : vector<48xf32> to vector<48x1xf32>
    %cst_39 = arith.constant 3.200000e+01 : f32
    %96 = vector.broadcast %cst_39 : f32 to vector<48x1xf32>
    %97 = arith.divf %95, %96 : vector<48x1xf32>
    %98 = vector.broadcast %90 : vector<48x1xf32> to vector<48x32xf32>
    %99 = arith.subf %86, %98 : vector<48x32xf32>
    %cst_40 = arith.constant 9.99999974E-6 : f32
    %100 = vector.broadcast %cst_40 : f32 to vector<48x1xf32>
    %101 = arith.addf %97, %100 : vector<48x1xf32>
    %102 = math.rsqrt %101 : vector<48x1xf32>
    %103 = vector.broadcast %102 : vector<48x1xf32> to vector<48x32xf32>
    %104 = arith.mulf %99, %103 : vector<48x32xf32>
    %105 = vector.broadcast %15 : vector<1x32xf32> to vector<48x32xf32>
    %106 = arith.mulf %104, %105 : vector<48x32xf32>
    %107 = vector.broadcast %16 : vector<1x32xf32> to vector<48x32xf32>
    %108 = arith.addf %106, %107 : vector<48x32xf32>
    %109 = arith.addf %21, %85 : vector<48x32xf32>
    %cst_41 = arith.constant dense<0.000000e+00> : vector<48xf32>
    %110 = vector.multi_reduction <add>, %109, %cst_41 [1] : vector<48x32xf32> to vector<48xf32>
    %111 = vector.shape_cast %110 : vector<48xf32> to vector<48x1xf32>
    %cst_42 = arith.constant 3.200000e+01 : f32
    %112 = vector.broadcast %cst_42 : f32 to vector<48x1xf32>
    %113 = arith.divf %111, %112 : vector<48x1xf32>
    %114 = vector.broadcast %113 : vector<48x1xf32> to vector<48x32xf32>
    %115 = arith.subf %109, %114 : vector<48x32xf32>
    %116 = arith.mulf %115, %115 : vector<48x32xf32>
    %cst_43 = arith.constant dense<0.000000e+00> : vector<48xf32>
    %117 = vector.multi_reduction <add>, %116, %cst_43 [1] : vector<48x32xf32> to vector<48xf32>
    %118 = vector.shape_cast %117 : vector<48xf32> to vector<48x1xf32>
    %cst_44 = arith.constant 3.200000e+01 : f32
    %119 = vector.broadcast %cst_44 : f32 to vector<48x1xf32>
    %120 = arith.divf %118, %119 : vector<48x1xf32>
    %121 = vector.broadcast %113 : vector<48x1xf32> to vector<48x32xf32>
    %122 = arith.subf %109, %121 : vector<48x32xf32>
    %cst_45 = arith.constant 9.99999974E-6 : f32
    %123 = vector.broadcast %cst_45 : f32 to vector<48x1xf32>
    %124 = arith.addf %120, %123 : vector<48x1xf32>
    %125 = math.rsqrt %124 : vector<48x1xf32>
    %126 = vector.broadcast %125 : vector<48x1xf32> to vector<48x32xf32>
    %127 = arith.mulf %122, %126 : vector<48x32xf32>
    %128 = vector.broadcast %15 : vector<1x32xf32> to vector<48x32xf32>
    %129 = arith.mulf %127, %128 : vector<48x32xf32>
    %130 = vector.broadcast %16 : vector<1x32xf32> to vector<48x32xf32>
    %131 = arith.addf %129, %130 : vector<48x32xf32>
    %132 = arith.truncf %108 : vector<48x32xf32> to vector<48x32xbf16>
    %cst_46 = arith.constant dense<0.000000e+00> : vector<48x32xf32>
    %133 = tpu.matmul %132, %7, %cst_46 {dimension_numbers = #tpu.dot_dimension_numbers<[1], [0], [0], [1], [0, 0, 1, 1], [], []>} : vector<48x32xbf16>, vector<32x32xbf16>, vector<48x32xf32> -> vector<48x32xf32>
    %134 = arith.truncf %131 : vector<48x32xf32> to vector<48x32xbf16>
    %cst_47 = arith.constant dense<0.000000e+00> : vector<48x32xf32>
    %135 = tpu.matmul %134, %9, %cst_47 {dimension_numbers = #tpu.dot_dimension_numbers<[1], [0], [0], [1], [0, 0, 1, 1], [], []>} : vector<48x32xbf16>, vector<32x32xbf16>, vector<48x32xf32> -> vector<48x32xf32>
    %136 = arith.addf %133, %135 : vector<48x32xf32>
    %137 = vector.broadcast %17 : vector<1x32xf32> to vector<48x32xf32>
    %138 = arith.addf %136, %137 : vector<48x32xf32>
    %cst_48 = arith.constant dense<0.000000e+00> : vector<32xf32>
    %139 = vector.multi_reduction <add>, %138, %cst_48 [0] : vector<48x32xf32> to vector<32xf32>
    %140 = vector.shape_cast %139 : vector<32xf32> to vector<1x32xf32>
    %cst_49 = arith.constant 4.800000e+01 : f32
    %141 = vector.broadcast %cst_49 : f32 to vector<1x32xf32>
    %142 = arith.divf %140, %141 : vector<1x32xf32>
    %143 = vector.broadcast %142 : vector<1x32xf32> to vector<48x32xf32>
    %144 = arith.subf %138, %143 : vector<48x32xf32>
    %145 = arith.mulf %144, %144 : vector<48x32xf32>
    %cst_50 = arith.constant dense<0.000000e+00> : vector<32xf32>
    %146 = vector.multi_reduction <add>, %145, %cst_50 [0] : vector<48x32xf32> to vector<32xf32>
    %147 = vector.shape_cast %146 : vector<32xf32> to vector<1x32xf32>
    %cst_51 = arith.constant 4.800000e+01 : f32
    %148 = vector.broadcast %cst_51 : f32 to vector<1x32xf32>
    %149 = arith.divf %147, %148 : vector<1x32xf32>
    %150 = vector.broadcast %142 : vector<1x32xf32> to vector<48x32xf32>
    %151 = arith.subf %138, %150 : vector<48x32xf32>
    %cst_52 = arith.constant 9.99999974E-6 : f32
    %152 = vector.broadcast %cst_52 : f32 to vector<1x32xf32>
    %153 = arith.addf %149, %152 : vector<1x32xf32>
    %154 = math.rsqrt %153 : vector<1x32xf32>
    %155 = vector.broadcast %154 : vector<1x32xf32> to vector<48x32xf32>
    %156 = arith.mulf %151, %155 : vector<48x32xf32>
    %157 = vector.broadcast %18 : vector<1x32xf32> to vector<48x32xf32>
    %158 = arith.mulf %156, %157 : vector<48x32xf32>
    %159 = vector.broadcast %19 : vector<1x32xf32> to vector<48x32xf32>
    %160 = arith.addf %158, %159 : vector<48x32xf32>
    %cst_53 = arith.constant 0.000000e+00 : f32
    %161 = vector.broadcast %cst_53 : f32 to vector<48x32xf32>
    %162 = arith.maximumf %160, %161 : vector<48x32xf32>
    %163 = vector.shape_cast %162 : vector<48x32xf32> to vector<2x24x32xf32>
    %c0_54 = arith.constant 0 : index
    %c0_55 = arith.constant 0 : index
    %c0_56 = arith.constant 0 : index
    %164 = vector.load %arg5[%c0_54, %c0_55, %c0_56] : memref<2x24x32xf32, #tpu.memory_space<vmem>>, vector<2x24x32xf32>
    tpu.vector_store %arg5[%c0_54, %c0_55, %c0_56], %163 {strides = array<i32>} : memref<2x24x32xf32, #tpu.memory_space<vmem>>, vector<2x24x32xf32>,
    return
  }
}

</mosaic_0001>

<llo_original>
// kernel: tpu_custom_call.1
$region0: #{tpu_custom_call.1}
  #allocation0 [shape = 'u32[]', space=smem, size = 0x4, offset = 0x4, fixed_abs, tag = 'smem constant byte address 0x4 - core index']
  #allocation1 [shape = 'u32[144,128]{1,0:T(1,128)}', space=vmem, size = 0x12000, scoped, tag = 'internal scratch']
  %s0 = inlined_call_operand.hbm [shape: f32[2,24,32], index: 0, kind: input, shape index: {}]
  %s1 = inlined_call_operand.hbm [shape: f32[2,16,32], index: 1, kind: input, shape index: {}]
  %s2 = inlined_call_operand.hbm [shape: f32[2,16,32], index: 2, kind: input, shape index: {}]
  %s3 = inlined_call_operand.hbm [shape: f32[32,224], index: 3, kind: input, shape index: {}]
  %s4 = inlined_call_operand.hbm [shape: f32[10,32], index: 4, kind: input, shape index: {}]
  %s5 = inlined_call_operand.hbm [shape: f32[2,24,32], index: 5, kind: output, shape index: {}]
  %s6 = sld [smem:[#allocation0]]
  $region50: #{tpu_custom_call.1} parent=0
    _
  %s8 = ssub.s32 1, %s6
  %s9 = scalar_select 0, %s8, %s6
  $region1: #{tpu_custom_call.1} parent=0
    #allocation2 [shape = 'u8[24576]{0}', space=vmem, size = 0x6000, scoped, tag = 'input window, operand 0, single buffered']
    #allocation3 [shape = 's32[1]{0}', space=sflag, size = 0x4, scoped, tag = 'scoped memory for tpu_custom_call.1']
    #allocation4 [shape = 's32[1]{0}', space=sflag, size = 0x4, scoped, tag = 'scoped memory for tpu_custom_call.1']
    #allocation5 [shape = 'u8[16384]{0}', space=vmem, size = 0x4000, scoped, tag = 'input window, operand 1, single buffered']
    #allocation6 [shape = 's32[1]{0}', space=sflag, size = 0x4, scoped, tag = 'scoped memory for tpu_custom_call.1']
    #allocation7 [shape = 'u8[16384]{0}', space=vmem, size = 0x4000, scoped, tag = 'input window, operand 2, single buffered']
    #allocation8 [shape = 'u8[32768]{0}', space=vmem, size = 0x8000, scoped, tag = 'input window, operand 3, single buffered']
    #allocation9 [shape = 's32[1]{0}', space=sflag, size = 0x4, scoped, tag = 'scoped memory for tpu_custom_call.1']
    #allocation10 [shape = 'u8[8192]{0}', space=vmem, size = 0x2000, scoped, tag = 'input window, operand 4, single buffered']
    #allocation11 [shape = 'u8[24576]{0}', space=vmem, size = 0x6000, scoped, tag = 'output window, operand 0, single buffered']
    %10 = vsyncpa [#allocation3], 0
    %11 = vsyncpa [#allocation6], 0
    %12 = vsyncpa [#allocation9], 0
    %13 = vsyncpa [#allocation4], 0
    // Predicated region
    $region2: #{tpu_custom_call.1} parent=1 // pred_check
      _
    $region3: #{tpu_custom_call.1} parent=1 // pred_check_branch
      %15 = sbr.rel (0) target = $region5
    $region4: #{tpu_custom_call.1} parent=1 // pred_region
      %s17 = ssub.s32 768, 768
      %18 = vsyncadd [#allocation3], %s17
      %s19 = sshll.u32 [#allocation2], 4
      %s20 = int_to_ptr.vmem [resolvable:$true] %s19
      %25 = dma.hbm_to_vmem [thread:$0]  %s0, 768, %s20, [#allocation3], 128, 128, 8
    $region5: #{tpu_custom_call.1} parent=1 // pred_fallthru
      _
    // Predicated region
    $region6: #{tpu_custom_call.1} parent=1 // pred_check
      _
    $region7: #{tpu_custom_call.1} parent=1 // pred_check_branch
      %27 = sbr.rel (0) target = $region9
    $region8: #{tpu_custom_call.1} parent=1 // pred_region
      %s29 = ssub.s32 512, 512
      %30 = vsyncadd [#allocation6], %s29
      %s31 = sshll.u32 [#allocation5], 4
      %s32 = int_to_ptr.vmem [resolvable:$true] %s31
      %37 = dma.hbm_to_vmem [thread:$0]  %s1, 512, %s32, [#allocation6], 128, 128, 8
    $region9: #{tpu_custom_call.1} parent=1 // pred_fallthru
      _
    // Predicated region
    $region10: #{tpu_custom_call.1} parent=1 // pred_check
      _
    $region11: #{tpu_custom_call.1} parent=1 // pred_check_branch
      %39 = sbr.rel (0) target = $region13
    $region12: #{tpu_custom_call.1} parent=1 // pred_region
      %s41 = ssub.s32 512, 512
      %42 = vsyncadd [#allocation6], %s41
      %s43 = sshll.u32 [#allocation7], 4
      %s44 = int_to_ptr.vmem [resolvable:$true] %s43
      %49 = dma.hbm_to_vmem [thread:$0]  %s2, 512, %s44, [#allocation6], 128, 128, 8
    $region13: #{tpu_custom_call.1} parent=1 // pred_fallthru
      _
    // Predicated region
    $region14: #{tpu_custom_call.1} parent=1 // pred_check
      _
    $region15: #{tpu_custom_call.1} parent=1 // pred_check_branch
      %51 = sbr.rel (0) target = $region17
    $region16: #{tpu_custom_call.1} parent=1 // pred_region
      %s53 = ssub.s32 1024, 1024
      %54 = vsyncadd [#allocation9], %s53
      %s55 = sshll.u32 [#allocation8], 4
      %s56 = int_to_ptr.vmem [resolvable:$true] %s55
      %61 = dma.hbm_to_vmem [thread:$0]  %s3, 1024, %s56, [#allocation9], 256, 256, 16
    $region17: #{tpu_custom_call.1} parent=1 // pred_fallthru
      _
    // Predicated region
    $region18: #{tpu_custom_call.1} parent=1 // pred_check
      _
    $region19: #{tpu_custom_call.1} parent=1 // pred_check_branch
      %63 = sbr.rel (0) target = $region21
    $region20: #{tpu_custom_call.1} parent=1 // pred_region
      %s65 = ssub.s32 256, 256
      %66 = vsyncadd [#allocation9], %s65
      %s67 = sshll.u32 [#allocation10], 4
      %s68 = int_to_ptr.vmem [resolvable:$true] %s67
      %73 = dma.hbm_to_vmem [thread:$0]  %s4, 256, %s68, [#allocation9], 128, 128, 8
    $region21: #{tpu_custom_call.1} parent=1 // pred_fallthru
      _
    // Predicated region
    $region22: #{tpu_custom_call.1} parent=1 // pred_check
      _
    $region23: #{tpu_custom_call.1} parent=1 // pred_check_branch
      %75 = sbr.rel (0) target = $region25
    $region24: #{tpu_custom_call.1} parent=1 // pred_region
      %76 = dma.done [#allocation3], 768
    $region25: #{tpu_custom_call.1} parent=1 // pred_fallthru
      _
    // Predicated region
    $region26: #{tpu_custom_call.1} parent=1 // pred_check
      _
    $region27: #{tpu_custom_call.1} parent=1 // pred_check_branch
      %78 = sbr.rel (0) target = $region29
    $region28: #{tpu_custom_call.1} parent=1 // pred_region
      %79 = dma.done [#allocation6], 512
    $region29: #{tpu_custom_call.1} parent=1 // pred_fallthru
      _
    // Predicated region
    $region30: #{tpu_custom_call.1} parent=1 // pred_check
      _
    $region31: #{tpu_custom_call.1} parent=1 // pred_check_branch
      %81 = sbr.rel (0) target = $region33
    $region32: #{tpu_custom_call.1} parent=1 // pred_region
      %82 = dma.done [#allocation6], 512
    $region33: #{tpu_custom_call.1} parent=1 // pred_fallthru
      _
    // Predicated region
    $region34: #{tpu_custom_call.1} parent=1 // pred_check
      _
    $region35: #{tpu_custom_call.1} parent=1 // pred_check_branch
      %84 = sbr.rel (0) target = $region37
    $region36: #{tpu_custom_call.1} parent=1 // pred_region
      %85 = dma.done [#allocation9], 1024
    $region37: #{tpu_custom_call.1} parent=1 // pred_fallthru
      _
    // Predicated region
    $region38: #{tpu_custom_call.1} parent=1 // pred_check
      _
    $region39: #{tpu_custom_call.1} parent=1 // pred_check_branch
      %87 = sbr.rel (0) target = $region41
    $region40: #{tpu_custom_call.1} parent=1 // pred_region
      %88 = dma.done [#allocation9], 256
    $region41: #{tpu_custom_call.1} parent=1 // pred_fallthru
      _
    %v90 = vld [vmem:[#allocation8] sm:$0xff]
    %v91 = vld [vmem:[#allocation8 + $0x10] sm:$0xff]
    %v92 = vld [vmem:[#allocation8 + $0x20] sm:$0xff]
    %v93 = vld [vmem:[#allocation8 + $0x30] sm:$0xff]
    %v94 = vpack.c.bf16 %v91, %v90
    %v95 = vpack.c.bf16 %v93, %v92
    %v96 = vld [vmem:[#allocation8 + $0x8] sm:$0xff]
    %v97 = vld [vmem:[#allocation8 + $0x18] sm:$0xff]
    %v98 = vld [vmem:[#allocation8 + $0x28] sm:$0xff]
    %v99 = vld [vmem:[#allocation8 + $0x38] sm:$0xff]
    %v100 = vpack.c.bf16 %v97, %v96
    %v101 = vpack.c.bf16 %v99, %v98
    %v102 = vld [vmem:[#allocation10] sm:$0x1]
    %v103 = vld [vmem:[#allocation10 + $0x1] sm:$0x1]
    %v104 = vld [vmem:[#allocation10 + $0x2] sm:$0x1]
    %v105 = vld [vmem:[#allocation10 + $0x3] sm:$0x1]
    %v106 = vld [vmem:[#allocation10 + $0x4] sm:$0x1]
    %v107 = vld [vmem:[#allocation10 + $0x5] sm:$0x1]
    %v108 = vld [vmem:[#allocation10 + $0x6] sm:$0x1]
    %v109 = vld [vmem:[#allocation10 + $0x7] sm:$0x1]
    %v110 = vld [vmem:[#allocation10 + $0x8] sm:$0x1]
    %v111 = vld [vmem:[#allocation10 + $0x9] sm:$0x1]
    %v112 = vld [vmem:[#allocation2] sm:$0xff]
    %v113 = vld [vmem:[#allocation2 + $0x8] sm:$0xff]
    %v114 = vld [vmem:[#allocation2 + $0x10] sm:$0xff]
    %v115 = vld [vmem:[#allocation2 + $0x18] sm:$0xff]
    %v116 = vld [vmem:[#allocation2 + $0x20] sm:$0xff]
    %v117 = vld [vmem:[#allocation2 + $0x28] sm:$0xff]
    %v118 = vld [vmem:[#allocation5] sm:$0xff]
    %v119 = vld [vmem:[#allocation5 + $0x8] sm:$0xff]
    %v120 = vld [vmem:[#allocation5 + $0x10] sm:$0xff]
    %v121 = vld [vmem:[#allocation5 + $0x18] sm:$0xff]
    %v122 = vld [vmem:[#allocation7] sm:$0xff]
    %v123 = vld [vmem:[#allocation7 + $0x8] sm:$0xff]
    %v124 = vld [vmem:[#allocation7 + $0x10] sm:$0xff]
    %v125 = vld [vmem:[#allocation7 + $0x18] sm:$0xff]
    %v126 = vpack.c.bf16 %v113, %v112
    %v127 = vpack.c.bf16 %v115, %v114
    %v128 = vpack.c.bf16 %v117, %v116
    %v129 = vlaneseq
    %v130 = vshrl.u32 %v129, 7
    %v131 = vsub.s32 0, %v130
    %v132 = vrot.slane %v102, %v131
    %vm133 = vcmask 261120
    %v135 = vsel %vm133, %v126, 0
    %v138 = vsel %vm133, %v127, 0
    %v141 = vsel %vm133, %v128, 0
    %143 = vmatprep.subr.bf16.mxu0 0
    %144 = vmatpush1.bf16.msra.mxu0 %v94
    %145 = vmatprep.subr.bf16.mxu0 0
    %146 = vmatpush1.bf16.msra.mxu0 %v95
    %147 = vmatprep.subr.bf16.mxu0 0
    %148 = vmatpush1.bf16.msra.mxu0 0
    %149 = vmatprep.subr.bf16.mxu0 0
    %150 = vmatpush1.bf16.msra.mxu0 0
    %151 = vmatprep.subr.bf16.mxu0 0
    %152 = vmatpush1.bf16.msra.mxu0 0
    %153 = vmatprep.subr.bf16.mxu0 0
    %154 = vmatpush1.bf16.msra.mxu0 0
    %155 = vmatprep.subr.bf16.mxu0 0
    %156 = vmatpush1.bf16.msra.mxu0 0
    %157 = vmatprep.subr.bf16.mxu0 0
    %158 = vmatpush1.bf16.msra.mxu0 0
    %159 = vmatprep.subr.bf16.mxu0 0
    %160 = vmatpush1.bf16.msra.mxu0 0
    %161 = vmatprep.subr.bf16.mxu0 0
    %162 = vmatpush1.bf16.msra.mxu0 0
    %163 = vmatprep.subr.bf16.mxu0 0
    %164 = vmatpush1.bf16.msra.mxu0 0
    %165 = vmatprep.subr.bf16.mxu0 0
    %166 = vmatpush1.bf16.msra.mxu0 0
    %167 = vmatprep.subr.bf16.mxu0 0
    %168 = vmatpush1.bf16.msra.mxu0 0
    %169 = vmatprep.subr.bf16.mxu0 0
    %170 = vmatpush1.bf16.msra.mxu0 0
    %171 = vmatprep.subr.bf16.mxu0 0
    %172 = vmatpush1.bf16.msra.mxu0 0
    %173 = vmatprep.subr.bf16.mxu0 0
    %174 = vmatpush1.bf16.msra.mxu0 0
    %175 = vmatprep.mubr.bf16.mxu0 0
    %176 = vmatmul.mubr.bf16.gmra.mrb[0].mxu0 %v135
    %v177 = vpop.f32.mrb[0].mxu0
    %v178 = vadd.f32 %v132, %v177
    %v179 = vpop.f32.mrb[0].mxu0
    %v180 = vpop.f32.mrb[0].mxu0
    %v181 = vadd.f32 %v132, %v180
    %v182 = vpop.f32.mrb[0].mxu0
    %183 = vmatprep.mubr.bf16.mxu0 0
    %184 = vmatmul.mubr.bf16.gmra.mrb[0].mxu0 %v138
    %v185 = vpop.f32.mrb[0].mxu0
    %v186 = vadd.f32 %v132, %v185
    %v187 = vpop.f32.mrb[0].mxu0
    %v188 = vpop.f32.mrb[0].mxu0
    %v189 = vadd.f32 %v132, %v188
    %v190 = vpop.f32.mrb[0].mxu0
    %191 = vmatprep.mubr.bf16.mxu0 0
    %192 = vmatmul.mubr.bf16.gmra.mrb[0].mxu0 %v141
    %v193 = vpop.f32.mrb[0].mxu0
    %v194 = vadd.f32 %v132, %v193
    %v195 = vpop.f32.mrb[0].mxu0
    %v196 = vpop.f32.mrb[0].mxu0
    %v197 = vadd.f32 %v132, %v196
    %v198 = vpop.f32.mrb[0].mxu0
    %199 = vdwg.mxu0
    %v200 = vmul.f32 %v178, 0.17677669
    %v201 = vmul.f32 %v181, 0.17677669
    %v202 = vmul.f32 %v186, 0.17677669
    %v203 = vmul.f32 %v189, 0.17677669
    %v204 = vmul.f32 %v194, 0.17677669
    %v205 = vmul.f32 %v197, 0.17677669
    %v206 = vpack.c.bf16 %v119, %v118
    %v207 = vpack.c.bf16 %v121, %v120
    %210 = vrot.lane.b32.xlu0 %v94, 96
    %v211 = vpop.permute.xlu0 %210
    %212 = vrot.lane.b32.xlu0 %v95, 96
    %v213 = vpop.permute.xlu0 %212
    %v217 = vsel %vm133, %v206, 0
    %v220 = vsel %vm133, %v207, 0
    %222 = vmatprep.subr.bf16.mxu0 0
    %223 = vmatpush1.bf16.msra.mxu0 %v211
    %224 = vmatprep.subr.bf16.mxu0 0
    %225 = vmatpush1.bf16.msra.mxu0 %v213
    %226 = vmatprep.subr.bf16.mxu0 0
    %227 = vmatpush1.bf16.msra.mxu0 0
    %228 = vmatprep.subr.bf16.mxu0 0
    %229 = vmatpush1.bf16.msra.mxu0 0
    %230 = vmatprep.subr.bf16.mxu0 0
    %231 = vmatpush1.bf16.msra.mxu0 0
    %232 = vmatprep.subr.bf16.mxu0 0
    %233 = vmatpush1.bf16.msra.mxu0 0
    %234 = vmatprep.subr.bf16.mxu0 0
    %235 = vmatpush1.bf16.msra.mxu0 0
    %236 = vmatprep.subr.bf16.mxu0 0
    %237 = vmatpush1.bf16.msra.mxu0 0
    %238 = vmatprep.subr.bf16.mxu0 0
    %239 = vmatpush1.bf16.msra.mxu0 0
    %240 = vmatprep.subr.bf16.mxu0 0
    %241 = vmatpush1.bf16.msra.mxu0 0
    %242 = vmatprep.subr.bf16.mxu0 0
    %243 = vmatpush1.bf16.msra.mxu0 0
    %244 = vmatprep.subr.bf16.mxu0 0
    %245 = vmatpush1.bf16.msra.mxu0 0
    %246 = vmatprep.subr.bf16.mxu0 0
    %247 = vmatpush1.bf16.msra.mxu0 0
    %248 = vmatprep.subr.bf16.mxu0 0
    %249 = vmatpush1.bf16.msra.mxu0 0
    %250 = vmatprep.subr.bf16.mxu0 0
    %251 = vmatpush1.bf16.msra.mxu0 0
    %252 = vmatprep.subr.bf16.mxu0 0
    %253 = vmatpush1.bf16.msra.mxu0 0
    %254 = vmatprep.mubr.bf16.mxu0 0
    %255 = vmatmul.mubr.bf16.gmra.mrb[0].mxu0 %v217
    %v256 = vpop.f32.mrb[0].mxu0
    %v257 = vadd.f32 0.0, %v256
    %v258 = vpop.f32.mrb[0].mxu0
    %v259 = vpop.f32.mrb[0].mxu0
    %v260 = vadd.f32 0.0, %v259
    %v261 = vpop.f32.mrb[0].mxu0
    %262 = vmatprep.mubr.bf16.mxu0 0
    %263 = vmatmul.mubr.bf16.gmra.mrb[0].mxu0 %v220
    %v264 = vpop.f32.mrb[0].mxu0
    %v265 = vadd.f32 0.0, %v264
    %v266 = vpop.f32.mrb[0].mxu0
    %v267 = vpop.f32.mrb[0].mxu0
    %v268 = vadd.f32 0.0, %v267
    %v269 = vpop.f32.mrb[0].mxu0
    %270 = vdwg.mxu0
    %v271 = vpack.c.bf16 %v123, %v122
    %v272 = vpack.c.bf16 %v125, %v124
    %275 = vrot.lane.b32.xlu0 %v94, 32
    %v276 = vpop.permute.xlu0 %275
    %277 = vrot.lane.b32.xlu0 %v100, 32
    %v278 = vpop.permute.xlu0 %277
    %279 = vrot.lane.b32.xlu0 %v95, 32
    %v280 = vpop.permute.xlu0 %279
    %281 = vrot.lane.b32.xlu0 %v101, 32
    %v282 = vpop.permute.xlu0 %281
    %vm283 = vcmask 261120
    %v284 = vsel %vm283, %v276, %v278
    %v285 = vsel %vm283, %v280, %v282
    %v289 = vsel %vm133, %v271, 0
    %v292 = vsel %vm133, %v272, 0
    %294 = vmatprep.subr.bf16.mxu0 0
    %295 = vmatpush1.bf16.msra.mxu0 %v284
    %296 = vmatprep.subr.bf16.mxu0 0
    %297 = vmatpush1.bf16.msra.mxu0 %v285
    %298 = vmatprep.subr.bf16.mxu0 0
    %299 = vmatpush1.bf16.msra.mxu0 0
    %300 = vmatprep.subr.bf16.mxu0 0
    %301 = vmatpush1.bf16.msra.mxu0 0
    %302 = vmatprep.subr.bf16.mxu0 0
    %303 = vmatpush1.bf16.msra.mxu0 0
    %304 = vmatprep.subr.bf16.mxu0 0
    %305 = vmatpush1.bf16.msra.mxu0 0
    %306 = vmatprep.subr.bf16.mxu0 0
    %307 = vmatpush1.bf16.msra.mxu0 0
    %308 = vmatprep.subr.bf16.mxu0 0
    %309 = vmatpush1.bf16.msra.mxu0 0
    %310 = vmatprep.subr.bf16.mxu0 0
    %311 = vmatpush1.bf16.msra.mxu0 0
    %312 = vmatprep.subr.bf16.mxu0 0
    %313 = vmatpush1.bf16.msra.mxu0 0
    %314 = vmatprep.subr.bf16.mxu0 0
    %315 = vmatpush1.bf16.msra.mxu0 0
    %316 = vmatprep.subr.bf16.mxu0 0
    %317 = vmatpush1.bf16.msra.mxu0 0
    %318 = vmatprep.subr.bf16.mxu0 0
    %319 = vmatpush1.bf16.msra.mxu0 0
    %320 = vmatprep.subr.bf16.mxu0 0
    %321 = vmatpush1.bf16.msra.mxu0 0
    %322 = vmatprep.subr.bf16.mxu0 0
    %323 = vmatpush1.bf16.msra.mxu0 0
    %324 = vmatprep.subr.bf16.mxu0 0
    %325 = vmatpush1.bf16.msra.mxu0 0
    %326 = vmatprep.mubr.bf16.mxu0 0
    %327 = vmatmul.mubr.bf16.gmra.mrb[0].mxu0 %v289
    %v328 = vpop.f32.mrb[0].mxu0
    %v329 = vadd.f32 0.0, %v328
    %v330 = vpop.f32.mrb[0].mxu0
    %v331 = vpop.f32.mrb[0].mxu0
    %v332 = vadd.f32 0.0, %v331
    %v333 = vpop.f32.mrb[0].mxu0
    %334 = vmatprep.mubr.bf16.mxu0 0
    %335 = vmatmul.mubr.bf16.gmra.mrb[0].mxu0 %v292
    %v336 = vpop.f32.mrb[0].mxu0
    %v337 = vadd.f32 0.0, %v336
    %v338 = vpop.f32.mrb[0].mxu0
    %v339 = vpop.f32.mrb[0].mxu0
    %v340 = vadd.f32 0.0, %v339
    %v341 = vpop.f32.mrb[0].mxu0
    %342 = vdwg.mxu0
    %v343 = vlaneseq
    %v344 = vshrl.u32 %v343, 7
    %v345 = vsub.s32 0, %v344
    %v346 = vrot.slane %v103, %v345
    %v347 = vadd.f32 %v257, %v346
    %v348 = vadd.f32 %v260, %v346
    %v349 = vadd.f32 %v265, %v346
    %v350 = vadd.f32 %v268, %v346
    %v351 = vlaneseq
    %v352 = vshrl.u32 %v351, 7
    %v353 = vsub.s32 0, %v352
    %v354 = vrot.slane %v104, %v353
    %356 = vrot.lane.b32.xlu0 %v354, 32
    %v357 = vpop.permute.xlu0 %356
    %v359 = vadd.f32 %v257, %v357
    %v360 = vadd.f32 %v260, %v357
    %v361 = vadd.f32 %v265, %v357
    %v362 = vadd.f32 %v268, %v357
    %v363 = vlaneseq
    %v364 = vshrl.u32 %v363, 7
    %v365 = vsub.s32 0, %v364
    %v366 = vrot.slane %v105, %v365
    %v367 = vadd.f32 %v329, %v366
    %v368 = vadd.f32 %v332, %v366
    %v369 = vadd.f32 %v337, %v366
    %v370 = vadd.f32 %v340, %v366
    %v371 = vlaneseq
    %v372 = vshrl.u32 %v371, 7
    %v373 = vsub.s32 0, %v372
    %v374 = vrot.slane %v106, %v373
    %376 = vrot.lane.b32.xlu0 %v374, 32
    %v377 = vpop.permute.xlu0 %376
    %v379 = vadd.f32 %v329, %v377
    %v380 = vadd.f32 %v332, %v377
    %v381 = vadd.f32 %v337, %v377
    %v382 = vadd.f32 %v340, %v377
    %v383 = vpack.c.bf16 %v201, %v200
    %v384 = vpack.c.bf16 %v202, %v202
    %v385 = vpack.c.bf16 %v204, %v203
    %v386 = vpack.c.bf16 %v205, %v205
    %v387 = vpack.c.bf16 %v348, %v347
    %v388 = vpack.c.bf16 %v350, %v349
    %v390 = vsel %vm133, %v383, 0
    %v393 = vsel %vm133, %v384, 0
    %v396 = vsel %vm133, %v387, 0
    %398 = vmatprep.subr.bf16.mxu0 0
    %399 = vmatpush1.bf16.xpose.msra.mxu0 %v396
    %400 = vmatprep.subr.bf16.mxu0 0
    %401 = vmatpush1.bf16.xpose.msra.mxu0 0
    %402 = vmatprep.subr.bf16.mxu0 0
    %403 = vmatpush1.bf16.xpose.msra.mxu0 0
    %404 = vmatprep.subr.bf16.mxu0 0
    %405 = vmatpush1.bf16.xpose.msra.mxu0 0
    %406 = vmatprep.subr.bf16.mxu0 0
    %407 = vmatpush1.bf16.xpose.msra.mxu0 0
    %408 = vmatprep.subr.bf16.mxu0 0
    %409 = vmatpush1.bf16.xpose.msra.mxu0 0
    %410 = vmatprep.subr.bf16.mxu0 0
    %411 = vmatpush1.bf16.xpose.msra.mxu0 0
    %412 = vmatprep.subr.bf16.mxu0 0
    %413 = vmatpush1.bf16.xpose.msra.mxu0 0
    %414 = vmatprep.subr.bf16.mxu0 0
    %415 = vmatpush1.bf16.xpose.msra.mxu0 0
    %416 = vmatprep.subr.bf16.mxu0 0
    %417 = vmatpush1.bf16.xpose.msra.mxu0 0
    %418 = vmatprep.subr.bf16.mxu0 0
    %419 = vmatpush1.bf16.xpose.msra.mxu0 0
    %420 = vmatprep.subr.bf16.mxu0 0
    %421 = vmatpush1.bf16.xpose.msra.mxu0 0
    %422 = vmatprep.subr.bf16.mxu0 0
    %423 = vmatpush1.bf16.xpose.msra.mxu0 0
    %424 = vmatprep.subr.bf16.mxu0 0
    %425 = vmatpush1.bf16.xpose.msra.mxu0 0
    %426 = vmatprep.subr.bf16.mxu0 0
    %427 = vmatpush1.bf16.xpose.msra.mxu0 0
    %428 = vmatprep.subr.bf16.mxu0 0
    %429 = vmatpush1.bf16.xpose.msra.mxu0 0
    %430 = vmatprep.mubr.bf16.mxu0 0
    %431 = vmatmul.mubr.bf16.gmra.mrb[0].mxu0 %v390
    %v432 = vpop.f32.mrb[0].mxu0
    %v433 = vadd.f32 0.0, %v432
    %v434 = vpop.f32.mrb[0].mxu0
    %v435 = vpop.f32.mrb[0].mxu0
    %v436 = vadd.f32 0.0, %v435
    %v437 = vpop.f32.mrb[0].mxu0
    %438 = vmatprep.mubr.bf16.mxu0 0
    %439 = vmatmul.mubr.bf16.gmra.mrb[0].mxu0 %v393
    %v440 = vpop.f32.mrb[0].mxu0
    %v441 = vadd.f32 0.0, %v440
    %v442 = vpop.f32.mrb[0].mxu0
    %v443 = vpop.f32.mrb[0].mxu0
    %v444 = vpop.f32.mrb[0].mxu0
    %445 = vdwg.mxu0
    %v447 = vsel %vm133, %v385, 0
    %v450 = vsel %vm133, %v386, 0
    %v453 = vsel %vm133, %v388, 0
    %455 = vmatprep.subr.bf16.mxu0 0
    %456 = vmatpush1.bf16.xpose.msra.mxu0 %v453
    %457 = vmatprep.subr.bf16.mxu0 0
    %458 = vmatpush1.bf16.xpose.msra.mxu0 0
    %459 = vmatprep.subr.bf16.mxu0 0
    %460 = vmatpush1.bf16.xpose.msra.mxu0 0
    %461 = vmatprep.subr.bf16.mxu0 0
    %462 = vmatpush1.bf16.xpose.msra.mxu0 0
    %463 = vmatprep.subr.bf16.mxu0 0
    %464 = vmatpush1.bf16.xpose.msra.mxu0 0
    %465 = vmatprep.subr.bf16.mxu0 0
    %466 = vmatpush1.bf16.xpose.msra.mxu0 0
    %467 = vmatprep.subr.bf16.mxu0 0
    %468 = vmatpush1.bf16.xpose.msra.mxu0 0
    %469 = vmatprep.subr.bf16.mxu0 0
    %470 = vmatpush1.bf16.xpose.msra.mxu0 0
    %471 = vmatprep.subr.bf16.mxu0 0
    %472 = vmatpush1.bf16.xpose.msra.mxu0 0
    %473 = vmatprep.subr.bf16.mxu0 0
    %474 = vmatpush1.bf16.xpose.msra.mxu0 0
    %475 = vmatprep.subr.bf16.mxu0 0
    %476 = vmatpush1.bf16.xpose.msra.mxu0 0
    %477 = vmatprep.subr.bf16.mxu0 0
    %478 = vmatpush1.bf16.xpose.msra.mxu0 0
    %479 = vmatprep.subr.bf16.mxu0 0
    %480 = vmatpush1.bf16.xpose.msra.mxu0 0
    %481 = vmatprep.subr.bf16.mxu0 0
    %482 = vmatpush1.bf16.xpose.msra.mxu0 0
    %483 = vmatprep.subr.bf16.mxu0 0
    %484 = vmatpush1.bf16.xpose.msra.mxu0 0
    %485 = vmatprep.subr.bf16.mxu0 0
    %486 = vmatpush1.bf16.xpose.msra.mxu0 0
    %487 = vmatprep.mubr.bf16.mxu0 0
    %488 = vmatmul.mubr.bf16.gmra.mrb[0].mxu0 %v447
    %v489 = vpop.f32.mrb[0].mxu0
    %v490 = vadd.f32 0.0, %v489
    %v491 = vpop.f32.mrb[0].mxu0
    %v492 = vpop.f32.mrb[0].mxu0
    %v493 = vadd.f32 0.0, %v492
    %v494 = vpop.f32.mrb[0].mxu0
    %495 = vmatprep.mubr.bf16.mxu0 0
    %496 = vmatmul.mubr.bf16.gmra.mrb[0].mxu0 %v450
    %v497 = vpop.f32.mrb[0].mxu0
    %v498 = vadd.f32 0.0, %v497
    %v499 = vpop.f32.mrb[0].mxu0
    %v500 = vpop.f32.mrb[0].mxu0
    %v501 = vpop.f32.mrb[0].mxu0
    %502 = vdwg.mxu0
    %vm503 = vcmask 130048
    %v504 = vsel %vm503, %v433, -inf
    %505 = vmax.xlane.f32.xlu0 %v504
    %v506 = vpop.xlane.xlu0 %505
    %v507 = vsel %vm503, %v436, -inf
    %508 = vmax.xlane.f32.xlu0 %v507
    %v509 = vpop.xlane.xlu0 %508
    %v510 = vsel %vm503, %v441, -inf
    %511 = vmax.xlane.f32.xlu0 %v510
    %v512 = vpop.xlane.xlu0 %511
    %v513 = vsel %vm503, %v490, -inf
    %514 = vmax.xlane.f32.xlu0 %v513
    %v515 = vpop.xlane.xlu0 %514
    %v516 = vsel %vm503, %v493, -inf
    %517 = vmax.xlane.f32.xlu0 %v516
    %v518 = vpop.xlane.xlu0 %517
    %v519 = vsel %vm503, %v498, -inf
    %520 = vmax.xlane.f32.xlu0 %v519
    %v521 = vpop.xlane.xlu0 %520
    %v522 = vsub.f32 %v433, %v506
    %v523 = vsub.f32 %v436, %v509
    %v524 = vsub.f32 %v441, %v512
    %v525 = vsub.f32 %v490, %v515
    %v526 = vsub.f32 %v493, %v518
    %v527 = vsub.f32 %v498, %v521
    %v528 = vmul.f32 %v522, 1.442695
    %v529 = vpow.pop %v528
    %v530 = vmul.f32 %v523, 1.442695
    %v531 = vpow.pop %v530
    %v532 = vmul.f32 %v524, 1.442695
    %v533 = vpow.pop %v532
    %v534 = vmul.f32 %v525, 1.442695
    %v535 = vpow.pop %v534
    %v536 = vmul.f32 %v526, 1.442695
    %v537 = vpow.pop %v536
    %v538 = vmul.f32 %v527, 1.442695
    %v539 = vpow.pop %v538
    %v540 = vsel %vm503, %v529, 0.0
    %541 = vadd.xlane.f32.xlu0 %v540
    %v542 = vpop.xlane.xlu0 %541
    %v543 = vsel %vm503, %v531, 0.0
    %544 = vadd.xlane.f32.xlu0 %v543
    %v545 = vpop.xlane.xlu0 %544
    %v546 = vsel %vm503, %v533, 0.0
    %547 = vadd.xlane.f32.xlu0 %v546
    %v548 = vpop.xlane.xlu0 %547
    %v549 = vsel %vm503, %v535, 0.0
    %550 = vadd.xlane.f32.xlu0 %v549
    %v551 = vpop.xlane.xlu0 %550
    %v552 = vsel %vm503, %v537, 0.0
    %553 = vadd.xlane.f32.xlu0 %v552
    %v554 = vpop.xlane.xlu0 %553
    %v555 = vsel %vm503, %v539, 0.0
    %556 = vadd.xlane.f32.xlu0 %v555
    %v557 = vpop.xlane.xlu0 %556
    %v558 = vrcp.pop %v542
    %v559 = vrcp.pop %v545
    %v560 = vrcp.pop %v548
    %v561 = vrcp.pop %v551
    %v562 = vrcp.pop %v554
    %v563 = vrcp.pop %v557
    %v564 = vmul.f32 %v529, %v558
    %v565 = vmul.f32 %v531, %v559
    %v566 = vmul.f32 %v533, %v560
    %v567 = vmul.f32 %v535, %v561
    %v568 = vmul.f32 %v537, %v562
    %v569 = vmul.f32 %v539, %v563
    %v570 = vpack.c.bf16 %v565, %v564
    %v571 = vpack.c.bf16 %v566, %v566
    %v572 = vpack.c.bf16 %v568, %v567
    %v573 = vpack.c.bf16 %v569, %v569
    %v574 = vpack.c.bf16 %v360, %v359
    %v575 = vpack.c.bf16 %v362, %v361
    %577 = vrot.lane.b32.xlu0 %v574, 96
    %v578 = vpop.permute.xlu0 %577
    %v581 = vsel %vm503, %v570, 0
    %v584 = vsel %vm503, %v571, 0
    %586 = vmatprep.subr.bf16.mxu0 0
    %587 = vmatpush1.bf16.msra.mxu0 %v578
    %588 = vmatprep.subr.bf16.mxu0 0
    %589 = vmatpush1.bf16.msra.mxu0 0
    %590 = vmatprep.subr.bf16.mxu0 0
    %591 = vmatpush1.bf16.msra.mxu0 0
    %592 = vmatprep.subr.bf16.mxu0 0
    %593 = vmatpush1.bf16.msra.mxu0 0
    %594 = vmatprep.subr.bf16.mxu0 0
    %595 = vmatpush1.bf16.msra.mxu0 0
    %596 = vmatprep.subr.bf16.mxu0 0
    %597 = vmatpush1.bf16.msra.mxu0 0
    %598 = vmatprep.subr.bf16.mxu0 0
    %599 = vmatpush1.bf16.msra.mxu0 0
    %600 = vmatprep.subr.bf16.mxu0 0
    %601 = vmatpush1.bf16.msra.mxu0 0
    %602 = vmatprep.subr.bf16.mxu0 0
    %603 = vmatpush1.bf16.msra.mxu0 0
    %604 = vmatprep.subr.bf16.mxu0 0
    %605 = vmatpush1.bf16.msra.mxu0 0
    %606 = vmatprep.subr.bf16.mxu0 0
    %607 = vmatpush1.bf16.msra.mxu0 0
    %608 = vmatprep.subr.bf16.mxu0 0
    %609 = vmatpush1.bf16.msra.mxu0 0
    %610 = vmatprep.subr.bf16.mxu0 0
    %611 = vmatpush1.bf16.msra.mxu0 0
    %612 = vmatprep.subr.bf16.mxu0 0
    %613 = vmatpush1.bf16.msra.mxu0 0
    %614 = vmatprep.subr.bf16.mxu0 0
    %615 = vmatpush1.bf16.msra.mxu0 0
    %616 = vmatprep.subr.bf16.mxu0 0
    %617 = vmatpush1.bf16.msra.mxu0 0
    %618 = vmatprep.mubr.bf16.mxu0 0
    %619 = vmatmul.mubr.bf16.gmra.mrb[0].mxu0 %v581
    %v620 = vpop.f32.mrb[0].mxu0
    %v621 = vadd.f32 0.0, %v620
    %v622 = vpop.f32.mrb[0].mxu0
    %v623 = vpop.f32.mrb[0].mxu0
    %v624 = vadd.f32 0.0, %v623
    %v625 = vpop.f32.mrb[0].mxu0
    %626 = vmatprep.mubr.bf16.mxu0 0
    %627 = vmatmul.mubr.bf16.gmra.mrb[0].mxu0 %v584
    %v628 = vpop.f32.mrb[0].mxu0
    %v629 = vadd.f32 0.0, %v628
    %v630 = vpop.f32.mrb[0].mxu0
    %v631 = vpop.f32.mrb[0].mxu0
    %v632 = vpop.f32.mrb[0].mxu0
    %633 = vdwg.mxu0
    %635 = vrot.lane.b32.xlu0 %v575, 96
    %v636 = vpop.permute.xlu0 %635
    %v639 = vsel %vm503, %v572, 0
    %v642 = vsel %vm503, %v573, 0
    %644 = vmatprep.subr.bf16.mxu0 0
    %645 = vmatpush1.bf16.msra.mxu0 %v636
    %646 = vmatprep.subr.bf16.mxu0 0
    %647 = vmatpush1.bf16.msra.mxu0 0
    %648 = vmatprep.subr.bf16.mxu0 0
    %649 = vmatpush1.bf16.msra.mxu0 0
    %650 = vmatprep.subr.bf16.mxu0 0
    %651 = vmatpush1.bf16.msra.mxu0 0
    %652 = vmatprep.subr.bf16.mxu0 0
    %653 = vmatpush1.bf16.msra.mxu0 0
    %654 = vmatprep.subr.bf16.mxu0 0
    %655 = vmatpush1.bf16.msra.mxu0 0
    %656 = vmatprep.subr.bf16.mxu0 0
    %657 = vmatpush1.bf16.msra.mxu0 0
    %658 = vmatprep.subr.bf16.mxu0 0
    %659 = vmatpush1.bf16.msra.mxu0 0
    %660 = vmatprep.subr.bf16.mxu0 0
    %661 = vmatpush1.bf16.msra.mxu0 0
    %662 = vmatprep.subr.bf16.mxu0 0
    %663 = vmatpush1.bf16.msra.mxu0 0
    %664 = vmatprep.subr.bf16.mxu0 0
    %665 = vmatpush1.bf16.msra.mxu0 0
    %666 = vmatprep.subr.bf16.mxu0 0
    %667 = vmatpush1.bf16.msra.mxu0 0
    %668 = vmatprep.subr.bf16.mxu0 0
    %669 = vmatpush1.bf16.msra.mxu0 0
    %670 = vmatprep.subr.bf16.mxu0 0
    %671 = vmatpush1.bf16.msra.mxu0 0
    %672 = vmatprep.subr.bf16.mxu0 0
    %673 = vmatpush1.bf16.msra.mxu0 0
    %674 = vmatprep.subr.bf16.mxu0 0
    %675 = vmatpush1.bf16.msra.mxu0 0
    %676 = vmatprep.mubr.bf16.mxu0 0
    %677 = vmatmul.mubr.bf16.gmra.mrb[0].mxu0 %v639
    %v678 = vpop.f32.mrb[0].mxu0
    %v679 = vadd.f32 0.0, %v678
    %v680 = vpop.f32.mrb[0].mxu0
    %v681 = vpop.f32.mrb[0].mxu0
    %v682 = vadd.f32 0.0, %v681
    %v683 = vpop.f32.mrb[0].mxu0
    %684 = vmatprep.mubr.bf16.mxu0 0
    %685 = vmatmul.mubr.bf16.gmra.mrb[0].mxu0 %v642
    %v686 = vpop.f32.mrb[0].mxu0
    %v687 = vadd.f32 0.0, %v686
    %v688 = vpop.f32.mrb[0].mxu0
    %v689 = vpop.f32.mrb[0].mxu0
    %v690 = vpop.f32.mrb[0].mxu0
    %691 = vdwg.mxu0
    %v692 = vpack.c.bf16 %v368, %v367
    %v693 = vpack.c.bf16 %v370, %v369
    %v695 = vsel %vm133, %v692, 0
    %697 = vmatprep.subr.bf16.mxu0 0
    %698 = vmatpush1.bf16.xpose.msra.mxu0 %v695
    %699 = vmatprep.subr.bf16.mxu0 0
    %700 = vmatpush1.bf16.xpose.msra.mxu0 0
    %701 = vmatprep.subr.bf16.mxu0 0
    %702 = vmatpush1.bf16.xpose.msra.mxu0 0
    %703 = vmatprep.subr.bf16.mxu0 0
    %704 = vmatpush1.bf16.xpose.msra.mxu0 0
    %705 = vmatprep.subr.bf16.mxu0 0
    %706 = vmatpush1.bf16.xpose.msra.mxu0 0
    %707 = vmatprep.subr.bf16.mxu0 0
    %708 = vmatpush1.bf16.xpose.msra.mxu0 0
    %709 = vmatprep.subr.bf16.mxu0 0
    %710 = vmatpush1.bf16.xpose.msra.mxu0 0
    %711 = vmatprep.subr.bf16.mxu0 0
    %712 = vmatpush1.bf16.xpose.msra.mxu0 0
    %713 = vmatprep.subr.bf16.mxu0 0
    %714 = vmatpush1.bf16.xpose.msra.mxu0 0
    %715 = vmatprep.subr.bf16.mxu0 0
    %716 = vmatpush1.bf16.xpose.msra.mxu0 0
    %717 = vmatprep.subr.bf16.mxu0 0
    %718 = vmatpush1.bf16.xpose.msra.mxu0 0
    %719 = vmatprep.subr.bf16.mxu0 0
    %720 = vmatpush1.bf16.xpose.msra.mxu0 0
    %721 = vmatprep.subr.bf16.mxu0 0
    %722 = vmatpush1.bf16.xpose.msra.mxu0 0
    %723 = vmatprep.subr.bf16.mxu0 0
    %724 = vmatpush1.bf16.xpose.msra.mxu0 0
    %725 = vmatprep.subr.bf16.mxu0 0
    %726 = vmatpush1.bf16.xpose.msra.mxu0 0
    %727 = vmatprep.subr.bf16.mxu0 0
    %728 = vmatpush1.bf16.xpose.msra.mxu0 0
    %729 = vmatprep.mubr.bf16.mxu0 0
    %730 = vmatmul.mubr.bf16.gmra.mrb[0].mxu0 %v390
    %v731 = vpop.f32.mrb[0].mxu0
    %v732 = vadd.f32 0.0, %v731
    %v733 = vpop.f32.mrb[0].mxu0
    %v734 = vpop.f32.mrb[0].mxu0
    %v735 = vadd.f32 0.0, %v734
    %v736 = vpop.f32.mrb[0].mxu0
    %737 = vmatprep.mubr.bf16.mxu0 0
    %738 = vmatmul.mubr.bf16.gmra.mrb[0].mxu0 %v393
    %v739 = vpop.f32.mrb[0].mxu0
    %v740 = vadd.f32 0.0, %v739
    %v741 = vpop.f32.mrb[0].mxu0
    %v742 = vpop.f32.mrb[0].mxu0
    %v743 = vpop.f32.mrb[0].mxu0
    %744 = vdwg.mxu0
    %v746 = vsel %vm133, %v693, 0
    %748 = vmatprep.subr.bf16.mxu0 0
    %749 = vmatpush1.bf16.xpose.msra.mxu0 %v746
    %750 = vmatprep.subr.bf16.mxu0 0
    %751 = vmatpush1.bf16.xpose.msra.mxu0 0
    %752 = vmatprep.subr.bf16.mxu0 0
    %753 = vmatpush1.bf16.xpose.msra.mxu0 0
    %754 = vmatprep.subr.bf16.mxu0 0
    %755 = vmatpush1.bf16.xpose.msra.mxu0 0
    %756 = vmatprep.subr.bf16.mxu0 0
    %757 = vmatpush1.bf16.xpose.msra.mxu0 0
    %758 = vmatprep.subr.bf16.mxu0 0
    %759 = vmatpush1.bf16.xpose.msra.mxu0 0
    %760 = vmatprep.subr.bf16.mxu0 0
    %761 = vmatpush1.bf16.xpose.msra.mxu0 0
    %762 = vmatprep.subr.bf16.mxu0 0
    %763 = vmatpush1.bf16.xpose.msra.mxu0 0
    %764 = vmatprep.subr.bf16.mxu0 0
    %765 = vmatpush1.bf16.xpose.msra.mxu0 0
    %766 = vmatprep.subr.bf16.mxu0 0
    %767 = vmatpush1.bf16.xpose.msra.mxu0 0
    %768 = vmatprep.subr.bf16.mxu0 0
    %769 = vmatpush1.bf16.xpose.msra.mxu0 0
    %770 = vmatprep.subr.bf16.mxu0 0
    %771 = vmatpush1.bf16.xpose.msra.mxu0 0
    %772 = vmatprep.subr.bf16.mxu0 0
    %773 = vmatpush1.bf16.xpose.msra.mxu0 0
    %774 = vmatprep.subr.bf16.mxu0 0
    %775 = vmatpush1.bf16.xpose.msra.mxu0 0
    %776 = vmatprep.subr.bf16.mxu0 0
    %777 = vmatpush1.bf16.xpose.msra.mxu0 0
    %778 = vmatprep.subr.bf16.mxu0 0
    %779 = vmatpush1.bf16.xpose.msra.mxu0 0
    %780 = vmatprep.mubr.bf16.mxu0 0
    %781 = vmatmul.mubr.bf16.gmra.mrb[0].mxu0 %v447
    %v782 = vpop.f32.mrb[0].mxu0
    %v783 = vadd.f32 0.0, %v782
    %v784 = vpop.f32.mrb[0].mxu0
    %v785 = vpop.f32.mrb[0].mxu0
    %v786 = vadd.f32 0.0, %v785
    %v787 = vpop.f32.mrb[0].mxu0
    %788 = vmatprep.mubr.bf16.mxu0 0
    %789 = vmatmul.mubr.bf16.gmra.mrb[0].mxu0 %v450
    %v790 = vpop.f32.mrb[0].mxu0
    %v791 = vadd.f32 0.0, %v790
    %v792 = vpop.f32.mrb[0].mxu0
    %v793 = vpop.f32.mrb[0].mxu0
    %v794 = vpop.f32.mrb[0].mxu0
    %795 = vdwg.mxu0
    %v796 = vsel %vm503, %v732, -inf
    %797 = vmax.xlane.f32.xlu0 %v796
    %v798 = vpop.xlane.xlu0 %797
    %v799 = vsel %vm503, %v735, -inf
    %800 = vmax.xlane.f32.xlu0 %v799
    %v801 = vpop.xlane.xlu0 %800
    %v802 = vsel %vm503, %v740, -inf
    %803 = vmax.xlane.f32.xlu0 %v802
    %v804 = vpop.xlane.xlu0 %803
    %v805 = vsel %vm503, %v783, -inf
    %806 = vmax.xlane.f32.xlu0 %v805
    %v807 = vpop.xlane.xlu0 %806
    %v808 = vsel %vm503, %v786, -inf
    %809 = vmax.xlane.f32.xlu0 %v808
    %v810 = vpop.xlane.xlu0 %809
    %v811 = vsel %vm503, %v791, -inf
    %812 = vmax.xlane.f32.xlu0 %v811
    %v813 = vpop.xlane.xlu0 %812
    %v814 = vsub.f32 %v732, %v798
    %v815 = vsub.f32 %v735, %v801
    %v816 = vsub.f32 %v740, %v804
    %v817 = vsub.f32 %v783, %v807
    %v818 = vsub.f32 %v786, %v810
    %v819 = vsub.f32 %v791, %v813
    %v820 = vmul.f32 %v814, 1.442695
    %v821 = vpow.pop %v820
    %v822 = vmul.f32 %v815, 1.442695
    %v823 = vpow.pop %v822
    %v824 = vmul.f32 %v816, 1.442695
    %v825 = vpow.pop %v824
    %v826 = vmul.f32 %v817, 1.442695
    %v827 = vpow.pop %v826
    %v828 = vmul.f32 %v818, 1.442695
    %v829 = vpow.pop %v828
    %v830 = vmul.f32 %v819, 1.442695
    %v831 = vpow.pop %v830
    %v832 = vsel %vm503, %v821, 0.0
    %833 = vadd.xlane.f32.xlu0 %v832
    %v834 = vpop.xlane.xlu0 %833
    %v835 = vsel %vm503, %v823, 0.0
    %836 = vadd.xlane.f32.xlu0 %v835
    %v837 = vpop.xlane.xlu0 %836
    %v838 = vsel %vm503, %v825, 0.0
    %839 = vadd.xlane.f32.xlu0 %v838
    %v840 = vpop.xlane.xlu0 %839
    %v841 = vsel %vm503, %v827, 0.0
    %842 = vadd.xlane.f32.xlu0 %v841
    %v843 = vpop.xlane.xlu0 %842
    %v844 = vsel %vm503, %v829, 0.0
    %845 = vadd.xlane.f32.xlu0 %v844
    %v846 = vpop.xlane.xlu0 %845
    %v847 = vsel %vm503, %v831, 0.0
    %848 = vadd.xlane.f32.xlu0 %v847
    %v849 = vpop.xlane.xlu0 %848
    %v850 = vrcp.pop %v834
    %v851 = vrcp.pop %v837
    %v852 = vrcp.pop %v840
    %v853 = vrcp.pop %v843
    %v854 = vrcp.pop %v846
    %v855 = vrcp.pop %v849
    %v856 = vmul.f32 %v821, %v850
    %v857 = vmul.f32 %v823, %v851
    %v858 = vmul.f32 %v825, %v852
    %v859 = vmul.f32 %v827, %v853
    %v860 = vmul.f32 %v829, %v854
    %v861 = vmul.f32 %v831, %v855
    %v862 = vpack.c.bf16 %v857, %v856
    %v863 = vpack.c.bf16 %v858, %v858
    %v864 = vpack.c.bf16 %v860, %v859
    %v865 = vpack.c.bf16 %v861, %v861
    %v866 = vpack.c.bf16 %v380, %v379
    %v867 = vpack.c.bf16 %v382, %v381
    %869 = vrot.lane.b32.xlu0 %v866, 96
    %v870 = vpop.permute.xlu0 %869
    %v873 = vsel %vm503, %v862, 0
    %v876 = vsel %vm503, %v863, 0
    %878 = vmatprep.subr.bf16.mxu0 0
    %879 = vmatpush1.bf16.msra.mxu0 %v870
    %880 = vmatprep.subr.bf16.mxu0 0
    %881 = vmatpush1.bf16.msra.mxu0 0
    %882 = vmatprep.subr.bf16.mxu0 0
    %883 = vmatpush1.bf16.msra.mxu0 0
    %884 = vmatprep.subr.bf16.mxu0 0
    %885 = vmatpush1.bf16.msra.mxu0 0
    %886 = vmatprep.subr.bf16.mxu0 0
    %887 = vmatpush1.bf16.msra.mxu0 0
    %888 = vmatprep.subr.bf16.mxu0 0
    %889 = vmatpush1.bf16.msra.mxu0 0
    %890 = vmatprep.subr.bf16.mxu0 0
    %891 = vmatpush1.bf16.msra.mxu0 0
    %892 = vmatprep.subr.bf16.mxu0 0
    %893 = vmatpush1.bf16.msra.mxu0 0
    %894 = vmatprep.subr.bf16.mxu0 0
    %895 = vmatpush1.bf16.msra.mxu0 0
    %896 = vmatprep.subr.bf16.mxu0 0
    %897 = vmatpush1.bf16.msra.mxu0 0
    %898 = vmatprep.subr.bf16.mxu0 0
    %899 = vmatpush1.bf16.msra.mxu0 0
    %900 = vmatprep.subr.bf16.mxu0 0
    %901 = vmatpush1.bf16.msra.mxu0 0
    %902 = vmatprep.subr.bf16.mxu0 0
    %903 = vmatpush1.bf16.msra.mxu0 0
    %904 = vmatprep.subr.bf16.mxu0 0
    %905 = vmatpush1.bf16.msra.mxu0 0
    %906 = vmatprep.subr.bf16.mxu0 0
    %907 = vmatpush1.bf16.msra.mxu0 0
    %908 = vmatprep.subr.bf16.mxu0 0
    %909 = vmatpush1.bf16.msra.mxu0 0
    %910 = vmatprep.mubr.bf16.mxu0 0
    %911 = vmatmul.mubr.bf16.gmra.mrb[0].mxu0 %v873
    %v912 = vpop.f32.mrb[0].mxu0
    %v913 = vadd.f32 0.0, %v912
    %v914 = vpop.f32.mrb[0].mxu0
    %v915 = vpop.f32.mrb[0].mxu0
    %v916 = vadd.f32 0.0, %v915
    %v917 = vpop.f32.mrb[0].mxu0
    %918 = vmatprep.mubr.bf16.mxu0 0
    %919 = vmatmul.mubr.bf16.gmra.mrb[0].mxu0 %v876
    %v920 = vpop.f32.mrb[0].mxu0
    %v921 = vadd.f32 0.0, %v920
    %v922 = vpop.f32.mrb[0].mxu0
    %v923 = vpop.f32.mrb[0].mxu0
    %v924 = vpop.f32.mrb[0].mxu0
    %925 = vdwg.mxu0
    %927 = vrot.lane.b32.xlu0 %v867, 96
    %v928 = vpop.permute.xlu0 %927
    %v931 = vsel %vm503, %v864, 0
    %v934 = vsel %vm503, %v865, 0
    %936 = vmatprep.subr.bf16.mxu0 0
    %937 = vmatpush1.bf16.msra.mxu0 %v928
    %938 = vmatprep.subr.bf16.mxu0 0
    %939 = vmatpush1.bf16.msra.mxu0 0
    %940 = vmatprep.subr.bf16.mxu0 0
    %941 = vmatpush1.bf16.msra.mxu0 0
    %942 = vmatprep.subr.bf16.mxu0 0
    %943 = vmatpush1.bf16.msra.mxu0 0
    %944 = vmatprep.subr.bf16.mxu0 0
    %945 = vmatpush1.bf16.msra.mxu0 0
    %946 = vmatprep.subr.bf16.mxu0 0
    %947 = vmatpush1.bf16.msra.mxu0 0
    %948 = vmatprep.subr.bf16.mxu0 0
    %949 = vmatpush1.bf16.msra.mxu0 0
    %950 = vmatprep.subr.bf16.mxu0 0
    %951 = vmatpush1.bf16.msra.mxu0 0
    %952 = vmatprep.subr.bf16.mxu0 0
    %953 = vmatpush1.bf16.msra.mxu0 0
    %954 = vmatprep.subr.bf16.mxu0 0
    %955 = vmatpush1.bf16.msra.mxu0 0
    %956 = vmatprep.subr.bf16.mxu0 0
    %957 = vmatpush1.bf16.msra.mxu0 0
    %958 = vmatprep.subr.bf16.mxu0 0
    %959 = vmatpush1.bf16.msra.mxu0 0
    %960 = vmatprep.subr.bf16.mxu0 0
    %961 = vmatpush1.bf16.msra.mxu0 0
    %962 = vmatprep.subr.bf16.mxu0 0
    %963 = vmatpush1.bf16.msra.mxu0 0
    %964 = vmatprep.subr.bf16.mxu0 0
    %965 = vmatpush1.bf16.msra.mxu0 0
    %966 = vmatprep.subr.bf16.mxu0 0
    %967 = vmatpush1.bf16.msra.mxu0 0
    %968 = vmatprep.mubr.bf16.mxu0 0
    %969 = vmatmul.mubr.bf16.gmra.mrb[0].mxu0 %v931
    %v970 = vpop.f32.mrb[0].mxu0
    %v971 = vadd.f32 0.0, %v970
    %v972 = vpop.f32.mrb[0].mxu0
    %v973 = vpop.f32.mrb[0].mxu0
    %v974 = vadd.f32 0.0, %v973
    %v975 = vpop.f32.mrb[0].mxu0
    %976 = vmatprep.mubr.bf16.mxu0 0
    %977 = vmatmul.mubr.bf16.gmra.mrb[0].mxu0 %v934
    %v978 = vpop.f32.mrb[0].mxu0
    %v979 = vadd.f32 0.0, %v978
    %v980 = vpop.f32.mrb[0].mxu0
    %v981 = vpop.f32.mrb[0].mxu0
    %v982 = vpop.f32.mrb[0].mxu0
    %983 = vdwg.mxu0
    %v984 = vadd.f32 %v112, %v621
    %v985 = vadd.f32 %v113, %v624
    %v986 = vadd.f32 %v114, %v629
    %v987 = vadd.f32 %v115, %v679
    %v988 = vadd.f32 %v116, %v682
    %v989 = vadd.f32 %v117, %v687
    %v990 = vsel %vm133, %v984, 0.0
    %991 = vadd.xlane.f32.xlu0 %v990
    %v992 = vpop.xlane.xlu0 %991
    %v993 = vsel %vm133, %v985, 0.0
    %994 = vadd.xlane.f32.xlu0 %v993
    %v995 = vpop.xlane.xlu0 %994
    %v996 = vsel %vm133, %v986, 0.0
    %997 = vadd.xlane.f32.xlu0 %v996
    %v998 = vpop.xlane.xlu0 %997
    %v999 = vsel %vm133, %v987, 0.0
    %1000 = vadd.xlane.f32.xlu0 %v999
    %v1001 = vpop.xlane.xlu0 %1000
    %v1002 = vsel %vm133, %v988, 0.0
    %1003 = vadd.xlane.f32.xlu0 %v1002
    %v1004 = vpop.xlane.xlu0 %1003
    %v1005 = vsel %vm133, %v989, 0.0
    %1006 = vadd.xlane.f32.xlu0 %v1005
    %v1007 = vpop.xlane.xlu0 %1006
    %v1008 = vrcp.pop 32.0
    %v1009 = vmul.f32 %v992, %v1008
    %v1010 = vmul.f32 %v995, %v1008
    %v1011 = vmul.f32 %v998, %v1008
    %v1012 = vmul.f32 %v1001, %v1008
    %v1013 = vmul.f32 %v1004, %v1008
    %v1014 = vmul.f32 %v1007, %v1008
    %v1015 = vsub.f32 %v984, %v1009
    %v1016 = vsub.f32 %v985, %v1010
    %v1017 = vsub.f32 %v986, %v1011
    %v1018 = vsub.f32 %v987, %v1012
    %v1019 = vsub.f32 %v988, %v1013
    %v1020 = vsub.f32 %v989, %v1014
    %v1021 = vmul.f32 %v1015, %v1015
    %v1022 = vmul.f32 %v1016, %v1016
    %v1023 = vmul.f32 %v1017, %v1017
    %v1024 = vmul.f32 %v1018, %v1018
    %v1025 = vmul.f32 %v1019, %v1019
    %v1026 = vmul.f32 %v1020, %v1020
    %v1027 = vsel %vm133, %v1021, 0.0
    %1028 = vadd.xlane.f32.xlu0 %v1027
    %v1029 = vpop.xlane.xlu0 %1028
    %v1030 = vsel %vm133, %v1022, 0.0
    %1031 = vadd.xlane.f32.xlu0 %v1030
    %v1032 = vpop.xlane.xlu0 %1031
    %v1033 = vsel %vm133, %v1023, 0.0
    %1034 = vadd.xlane.f32.xlu0 %v1033
    %v1035 = vpop.xlane.xlu0 %1034
    %v1036 = vsel %vm133, %v1024, 0.0
    %1037 = vadd.xlane.f32.xlu0 %v1036
    %v1038 = vpop.xlane.xlu0 %1037
    %v1039 = vsel %vm133, %v1025, 0.0
    %1040 = vadd.xlane.f32.xlu0 %v1039
    %v1041 = vpop.xlane.xlu0 %1040
    %v1042 = vsel %vm133, %v1026, 0.0
    %1043 = vadd.xlane.f32.xlu0 %v1042
    %v1044 = vpop.xlane.xlu0 %1043
    %v1045 = vmul.f32 %v1029, %v1008
    %v1046 = vmul.f32 %v1032, %v1008
    %v1047 = vmul.f32 %v1035, %v1008
    %v1048 = vmul.f32 %v1038, %v1008
    %v1049 = vmul.f32 %v1041, %v1008
    %v1050 = vmul.f32 %v1044, %v1008
    %v1051 = vadd.f32 %v1045, 1e-05
    %v1052 = vadd.f32 %v1046, 1e-05
    %v1053 = vadd.f32 %v1047, 1e-05
    %v1054 = vadd.f32 %v1048, 1e-05
    %v1055 = vadd.f32 %v1049, 1e-05
    %v1056 = vadd.f32 %v1050, 1e-05
    %v1057 = vrsqrt.pop %v1051
    %v1058 = vrsqrt.pop %v1052
    %v1059 = vrsqrt.pop %v1053
    %v1060 = vrsqrt.pop %v1054
    %v1061 = vrsqrt.pop %v1055
    %v1062 = vrsqrt.pop %v1056
    %v1063 = vmul.f32 %v1015, %v1057
    %v1064 = vmul.f32 %v1016, %v1058
    %v1065 = vmul.f32 %v1017, %v1059
    %v1066 = vmul.f32 %v1018, %v1060
    %v1067 = vmul.f32 %v1019, %v1061
    %v1068 = vmul.f32 %v1020, %v1062
    %v1069 = vlaneseq
    %v1070 = vshrl.u32 %v1069, 7
    %v1071 = vsub.s32 0, %v1070
    %v1072 = vrot.slane %v107, %v1071
    %v1073 = vmul.f32 %v1063, %v1072
    %v1074 = vmul.f32 %v1064, %v1072
    %v1075 = vmul.f32 %v1065, %v1072
    %v1076 = vmul.f32 %v1066, %v1072
    %v1077 = vmul.f32 %v1067, %v1072
    %v1078 = vmul.f32 %v1068, %v1072
    %v1079 = vlaneseq
    %v1080 = vshrl.u32 %v1079, 7
    %v1081 = vsub.s32 0, %v1080
    %v1082 = vrot.slane %v108, %v1081
    %v1083 = vadd.f32 %v1073, %v1082
    %v1084 = vadd.f32 %v1074, %v1082
    %v1085 = vadd.f32 %v1075, %v1082
    %v1086 = vadd.f32 %v1076, %v1082
    %v1087 = vadd.f32 %v1077, %v1082
    %v1088 = vadd.f32 %v1078, %v1082
    %v1089 = vadd.f32 %v112, %v913
    %v1090 = vadd.f32 %v113, %v916
    %v1091 = vadd.f32 %v114, %v921
    %v1092 = vadd.f32 %v115, %v971
    %v1093 = vadd.f32 %v116, %v974
    %v1094 = vadd.f32 %v117, %v979
    %v1095 = vsel %vm133, %v1089, 0.0
    %1096 = vadd.xlane.f32.xlu0 %v1095
    %v1097 = vpop.xlane.xlu0 %1096
    %v1098 = vsel %vm133, %v1090, 0.0
    %1099 = vadd.xlane.f32.xlu0 %v1098
    %v1100 = vpop.xlane.xlu0 %1099
    %v1101 = vsel %vm133, %v1091, 0.0
    %1102 = vadd.xlane.f32.xlu0 %v1101
    %v1103 = vpop.xlane.xlu0 %1102
    %v1104 = vsel %vm133, %v1092, 0.0
    %1105 = vadd.xlane.f32.xlu0 %v1104
    %v1106 = vpop.xlane.xlu0 %1105
    %v1107 = vsel %vm133, %v1093, 0.0
    %1108 = vadd.xlane.f32.xlu0 %v1107
    %v1109 = vpop.xlane.xlu0 %1108
    %v1110 = vsel %vm133, %v1094, 0.0
    %1111 = vadd.xlane.f32.xlu0 %v1110
    %v1112 = vpop.xlane.xlu0 %1111
    %v1113 = vmul.f32 %v1097, %v1008
    %v1114 = vmul.f32 %v1100, %v1008
    %v1115 = vmul.f32 %v1103, %v1008
    %v1116 = vmul.f32 %v1106, %v1008
    %v1117 = vmul.f32 %v1109, %v1008
    %v1118 = vmul.f32 %v1112, %v1008
    %v1119 = vsub.f32 %v1089, %v1113
    %v1120 = vsub.f32 %v1090, %v1114
    %v1121 = vsub.f32 %v1091, %v1115
    %v1122 = vsub.f32 %v1092, %v1116
    %v1123 = vsub.f32 %v1093, %v1117
    %v1124 = vsub.f32 %v1094, %v1118
    %v1125 = vmul.f32 %v1119, %v1119
    %v1126 = vmul.f32 %v1120, %v1120
    %v1127 = vmul.f32 %v1121, %v1121
    %v1128 = vmul.f32 %v1122, %v1122
    %v1129 = vmul.f32 %v1123, %v1123
    %v1130 = vmul.f32 %v1124, %v1124
    %v1131 = vsel %vm133, %v1125, 0.0
    %1132 = vadd.xlane.f32.xlu0 %v1131
    %v1133 = vpop.xlane.xlu0 %1132
    %v1134 = vsel %vm133, %v1126, 0.0
    %1135 = vadd.xlane.f32.xlu0 %v1134
    %v1136 = vpop.xlane.xlu0 %1135
    %v1137 = vsel %vm133, %v1127, 0.0
    %1138 = vadd.xlane.f32.xlu0 %v1137
    %v1139 = vpop.xlane.xlu0 %1138
    %v1140 = vsel %vm133, %v1128, 0.0
    %1141 = vadd.xlane.f32.xlu0 %v1140
    %v1142 = vpop.xlane.xlu0 %1141
    %v1143 = vsel %vm133, %v1129, 0.0
    %1144 = vadd.xlane.f32.xlu0 %v1143
    %v1145 = vpop.xlane.xlu0 %1144
    %v1146 = vsel %vm133, %v1130, 0.0
    %1147 = vadd.xlane.f32.xlu0 %v1146
    %v1148 = vpop.xlane.xlu0 %1147
    %v1149 = vmul.f32 %v1133, %v1008
    %v1150 = vmul.f32 %v1136, %v1008
    %v1151 = vmul.f32 %v1139, %v1008
    %v1152 = vmul.f32 %v1142, %v1008
    %v1153 = vmul.f32 %v1145, %v1008
    %v1154 = vmul.f32 %v1148, %v1008
    %v1155 = vadd.f32 %v1149, 1e-05
    %v1156 = vadd.f32 %v1150, 1e-05
    %v1157 = vadd.f32 %v1151, 1e-05
    %v1158 = vadd.f32 %v1152, 1e-05
    %v1159 = vadd.f32 %v1153, 1e-05
    %v1160 = vadd.f32 %v1154, 1e-05
    %v1161 = vrsqrt.pop %v1155
    %v1162 = vrsqrt.pop %v1156
    %v1163 = vrsqrt.pop %v1157
    %v1164 = vrsqrt.pop %v1158
    %v1165 = vrsqrt.pop %v1159
    %v1166 = vrsqrt.pop %v1160
    %v1167 = vmul.f32 %v1119, %v1161
    %v1168 = vmul.f32 %v1120, %v1162
    %v1169 = vmul.f32 %v1121, %v1163
    %v1170 = vmul.f32 %v1122, %v1164
    %v1171 = vmul.f32 %v1123, %v1165
    %v1172 = vmul.f32 %v1124, %v1166
    %v1173 = vmul.f32 %v1167, %v1072
    %v1174 = vmul.f32 %v1168, %v1072
    %v1175 = vmul.f32 %v1169, %v1072
    %v1176 = vmul.f32 %v1170, %v1072
    %v1177 = vmul.f32 %v1171, %v1072
    %v1178 = vmul.f32 %v1172, %v1072
    %v1179 = vadd.f32 %v1173, %v1082
    %v1180 = vadd.f32 %v1174, %v1082
    %v1181 = vadd.f32 %v1175, %v1082
    %v1182 = vadd.f32 %v1176, %v1082
    %v1183 = vadd.f32 %v1177, %v1082
    %v1184 = vadd.f32 %v1178, %v1082
    %v1185 = vpack.c.bf16 %v1084, %v1083
    %v1186 = vpack.c.bf16 %v1086, %v1085
    %v1187 = vpack.c.bf16 %v1088, %v1087
    %v1188 = vpack.c.bf16 %v1180, %v1179
    %v1189 = vpack.c.bf16 %v1182, %v1181
    %v1190 = vpack.c.bf16 %v1184, %v1183
    %1191 = vrot.lane.b32.xlu0 %v100, 64
    %v1192 = vpop.permute.xlu0 %1191
    %1193 = vrot.lane.b32.xlu0 %v101, 64
    %v1194 = vpop.permute.xlu0 %1193
    %v1198 = vsel %vm133, %v1188, 0
    %v1201 = vsel %vm133, %v1189, 0
    %v1204 = vsel %vm133, %v1190, 0
    %1206 = vmatprep.subr.bf16.mxu0 0
    %1207 = vmatpush1.bf16.msra.mxu0 %v1192
    %1208 = vmatprep.subr.bf16.mxu0 0
    %1209 = vmatpush1.bf16.msra.mxu0 %v1194
    %1210 = vmatprep.subr.bf16.mxu0 0
    %1211 = vmatpush1.bf16.msra.mxu0 0
    %1212 = vmatprep.subr.bf16.mxu0 0
    %1213 = vmatpush1.bf16.msra.mxu0 0
    %1214 = vmatprep.subr.bf16.mxu0 0
    %1215 = vmatpush1.bf16.msra.mxu0 0
    %1216 = vmatprep.subr.bf16.mxu0 0
    %1217 = vmatpush1.bf16.msra.mxu0 0
    %1218 = vmatprep.subr.bf16.mxu0 0
    %1219 = vmatpush1.bf16.msra.mxu0 0
    %1220 = vmatprep.subr.bf16.mxu0 0
    %1221 = vmatpush1.bf16.msra.mxu0 0
    %1222 = vmatprep.subr.bf16.mxu0 0
    %1223 = vmatpush1.bf16.msra.mxu0 0
    %1224 = vmatprep.subr.bf16.mxu0 0
    %1225 = vmatpush1.bf16.msra.mxu0 0
    %1226 = vmatprep.subr.bf16.mxu0 0
    %1227 = vmatpush1.bf16.msra.mxu0 0
    %1228 = vmatprep.subr.bf16.mxu0 0
    %1229 = vmatpush1.bf16.msra.mxu0 0
    %1230 = vmatprep.subr.bf16.mxu0 0
    %1231 = vmatpush1.bf16.msra.mxu0 0
    %1232 = vmatprep.subr.bf16.mxu0 0
    %1233 = vmatpush1.bf16.msra.mxu0 0
    %1234 = vmatprep.subr.bf16.mxu0 0
    %1235 = vmatpush1.bf16.msra.mxu0 0
    %1236 = vmatprep.subr.bf16.mxu0 0
    %1237 = vmatpush1.bf16.msra.mxu0 0
    %1238 = vmatprep.mubr.bf16.mxu0 0
    %1239 = vmatmul.mubr.bf16.gmra.mrb[0].mxu0 %v1198
    %v1240 = vpop.f32.mrb[0].mxu0
    %v1241 = vadd.f32 0.0, %v1240
    %v1242 = vpop.f32.mrb[0].mxu0
    %v1243 = vpop.f32.mrb[0].mxu0
    %v1244 = vadd.f32 0.0, %v1243
    %v1245 = vpop.f32.mrb[0].mxu0
    %1246 = vmatprep.mubr.bf16.mxu0 0
    %1247 = vmatmul.mubr.bf16.gmra.mrb[0].mxu0 %v1201
    %v1248 = vpop.f32.mrb[0].mxu0
    %v1249 = vadd.f32 0.0, %v1248
    %v1250 = vpop.f32.mrb[0].mxu0
    %v1251 = vpop.f32.mrb[0].mxu0
    %v1252 = vadd.f32 0.0, %v1251
    %v1253 = vpop.f32.mrb[0].mxu0
    %1254 = vmatprep.mubr.bf16.mxu0 0
    %1255 = vmatmul.mubr.bf16.gmra.mrb[0].mxu0 %v1204
    %v1256 = vpop.f32.mrb[0].mxu0
    %v1257 = vadd.f32 0.0, %v1256
    %v1258 = vpop.f32.mrb[0].mxu0
    %v1259 = vpop.f32.mrb[0].mxu0
    %v1260 = vadd.f32 0.0, %v1259
    %v1261 = vpop.f32.mrb[0].mxu0
    %1262 = vdwg.mxu0
    %1263 = vrot.lane.b32.xlu0 %v100, 96
    %v1264 = vpop.permute.xlu0 %1263
    %1265 = vrot.lane.b32.xlu0 %v101, 96
    %v1266 = vpop.permute.xlu0 %1265
    %v1270 = vsel %vm133, %v1185, 0
    %v1273 = vsel %vm133, %v1186, 0
    %v1276 = vsel %vm133, %v1187, 0
    %1278 = vmatprep.subr.bf16.mxu0 0
    %1279 = vmatpush1.bf16.msra.mxu0 %v1264
    %1280 = vmatprep.subr.bf16.mxu0 0
    %1281 = vmatpush1.bf16.msra.mxu0 %v1266
    %1282 = vmatprep.subr.bf16.mxu0 0
    %1283 = vmatpush1.bf16.msra.mxu0 0
    %1284 = vmatprep.subr.bf16.mxu0 0
    %1285 = vmatpush1.bf16.msra.mxu0 0
    %1286 = vmatprep.subr.bf16.mxu0 0
    %1287 = vmatpush1.bf16.msra.mxu0 0
    %1288 = vmatprep.subr.bf16.mxu0 0
    %1289 = vmatpush1.bf16.msra.mxu0 0
    %1290 = vmatprep.subr.bf16.mxu0 0
    %1291 = vmatpush1.bf16.msra.mxu0 0
    %1292 = vmatprep.subr.bf16.mxu0 0
    %1293 = vmatpush1.bf16.msra.mxu0 0
    %1294 = vmatprep.subr.bf16.mxu0 0
    %1295 = vmatpush1.bf16.msra.mxu0 0
    %1296 = vmatprep.subr.bf16.mxu0 0
    %1297 = vmatpush1.bf16.msra.mxu0 0
    %1298 = vmatprep.subr.bf16.mxu0 0
    %1299 = vmatpush1.bf16.msra.mxu0 0
    %1300 = vmatprep.subr.bf16.mxu0 0
    %1301 = vmatpush1.bf16.msra.mxu0 0
    %1302 = vmatprep.subr.bf16.mxu0 0
    %1303 = vmatpush1.bf16.msra.mxu0 0
    %1304 = vmatprep.subr.bf16.mxu0 0
    %1305 = vmatpush1.bf16.msra.mxu0 0
    %1306 = vmatprep.subr.bf16.mxu0 0
    %1307 = vmatpush1.bf16.msra.mxu0 0
    %1308 = vmatprep.subr.bf16.mxu0 0
    %1309 = vmatpush1.bf16.msra.mxu0 0
    %1310 = vmatprep.mubr.bf16.mxu0 0
    %1311 = vmatmul.mubr.bf16.gmra.mrb[0].mxu0 %v1270
    %v1312 = vpop.f32.mrb[0].mxu0
    %v1313 = vadd.f32 %v1241, %v1312
    %v1314 = vpop.f32.mrb[0].mxu0
    %v1315 = vpop.f32.mrb[0].mxu0
    %v1316 = vadd.f32 %v1244, %v1315
    %v1317 = vpop.f32.mrb[0].mxu0
    %1318 = vmatprep.mubr.bf16.mxu0 0
    %1319 = vmatmul.mubr.bf16.gmra.mrb[0].mxu0 %v1273
    %v1320 = vpop.f32.mrb[0].mxu0
    %v1321 = vadd.f32 %v1249, %v1320
    %v1322 = vpop.f32.mrb[0].mxu0
    %v1323 = vpop.f32.mrb[0].mxu0
    %v1324 = vadd.f32 %v1252, %v1323
    %v1325 = vpop.f32.mrb[0].mxu0
    %1326 = vmatprep.mubr.bf16.mxu0 0
    %1327 = vmatmul.mubr.bf16.gmra.mrb[0].mxu0 %v1276
    %v1328 = vpop.f32.mrb[0].mxu0
    %v1329 = vadd.f32 %v1257, %v1328
    %v1330 = vpop.f32.mrb[0].mxu0
    %v1331 = vpop.f32.mrb[0].mxu0
    %v1332 = vadd.f32 %v1260, %v1331
    %v1333 = vpop.f32.mrb[0].mxu0
    %1334 = vdwg.mxu0
    %v1335 = vlaneseq
    %v1336 = vshrl.u32 %v1335, 7
    %v1337 = vsub.s32 0, %v1336
    %v1338 = vrot.slane %v109, %v1337
    %v1339 = vadd.f32 %v1313, %v1338
    %v1340 = vadd.f32 %v1316, %v1338
    %v1341 = vadd.f32 %v1321, %v1338
    %v1342 = vadd.f32 %v1324, %v1338
    %v1343 = vadd.f32 %v1329, %v1338
    %v1344 = vadd.f32 %v1332, %v1338
    %v1345 = vsel %vm133, %v1339, 0.0
    %v1346 = vsel %vm133, %v1340, 0.0
    %v1347 = vadd.f32 %v1345, %v1346
    %v1348 = vsel %vm133, %v1341, 0.0
    %v1349 = vadd.f32 %v1347, %v1348
    %v1350 = vsel %vm133, %v1342, 0.0
    %v1351 = vadd.f32 %v1349, %v1350
    %v1352 = vsel %vm133, %v1343, 0.0
    %v1353 = vadd.f32 %v1351, %v1352
    %v1354 = vsel %vm133, %v1344, 0.0
    %v1355 = vadd.f32 %v1353, %v1354
    %v1356 = vrot.slane %v1355, 4
    %v1357 = vadd.f32 %v1355, %v1356
    %v1358 = vrot.slane %v1357, 2
    %v1359 = vadd.f32 %v1357, %v1358
    %v1360 = vrot.slane %v1359, 1
    %v1361 = vadd.f32 %v1359, %v1360
    %v1362 = vrcp.pop 48.0
    %v1363 = vmul.f32 %v1361, %v1362
    %v1364 = vsub.f32 %v1339, %v1363
    %v1365 = vsub.f32 %v1340, %v1363
    %v1366 = vsub.f32 %v1341, %v1363
    %v1367 = vsub.f32 %v1342, %v1363
    %v1368 = vsub.f32 %v1343, %v1363
    %v1369 = vsub.f32 %v1344, %v1363
    %v1370 = vmul.f32 %v1364, %v1364
    %v1371 = vmul.f32 %v1365, %v1365
    %v1372 = vmul.f32 %v1366, %v1366
    %v1373 = vmul.f32 %v1367, %v1367
    %v1374 = vmul.f32 %v1368, %v1368
    %v1375 = vmul.f32 %v1369, %v1369
    %v1376 = vsel %vm133, %v1370, 0.0
    %v1377 = vsel %vm133, %v1371, 0.0
    %v1378 = vadd.f32 %v1376, %v1377
    %v1379 = vsel %vm133, %v1372, 0.0
    %v1380 = vadd.f32 %v1378, %v1379
    %v1381 = vsel %vm133, %v1373, 0.0
    %v1382 = vadd.f32 %v1380, %v1381
    %v1383 = vsel %vm133, %v1374, 0.0
    %v1384 = vadd.f32 %v1382, %v1383
    %v1385 = vsel %vm133, %v1375, 0.0
    %v1386 = vadd.f32 %v1384, %v1385
    %v1387 = vrot.slane %v1386, 4
    %v1388 = vadd.f32 %v1386, %v1387
    %v1389 = vrot.slane %v1388, 2
    %v1390 = vadd.f32 %v1388, %v1389
    %v1391 = vrot.slane %v1390, 1
    %v1392 = vadd.f32 %v1390, %v1391
    %v1393 = vmul.f32 %v1392, %v1362
    %v1394 = vadd.f32 %v1393, 1e-05
    %v1395 = vrsqrt.pop %v1394
    %v1396 = vmul.f32 %v1364, %v1395
    %v1397 = vmul.f32 %v1365, %v1395
    %v1398 = vmul.f32 %v1366, %v1395
    %v1399 = vmul.f32 %v1367, %v1395
    %v1400 = vmul.f32 %v1368, %v1395
    %v1401 = vmul.f32 %v1369, %v1395
    %v1402 = vlaneseq
    %v1403 = vshrl.u32 %v1402, 7
    %v1404 = vsub.s32 0, %v1403
    %v1405 = vrot.slane %v110, %v1404
    %v1406 = vmul.f32 %v1396, %v1405
    %v1407 = vmul.f32 %v1397, %v1405
    %v1408 = vmul.f32 %v1398, %v1405
    %v1409 = vmul.f32 %v1399, %v1405
    %v1410 = vmul.f32 %v1400, %v1405
    %v1411 = vmul.f32 %v1401, %v1405
    %v1412 = vlaneseq
    %v1413 = vshrl.u32 %v1412, 7
    %v1414 = vsub.s32 0, %v1413
    %v1415 = vrot.slane %v111, %v1414
    %v1416 = vadd.f32 %v1406, %v1415
    %v1417 = vadd.f32 %v1407, %v1415
    %v1418 = vadd.f32 %v1408, %v1415
    %v1419 = vadd.f32 %v1409, %v1415
    %v1420 = vadd.f32 %v1410, %v1415
    %v1421 = vadd.f32 %v1411, %v1415
    %v1422 = vmax.f32 %v1416, 0.0
    %v1423 = vmax.f32 %v1417, 0.0
    %v1424 = vmax.f32 %v1418, 0.0
    %v1425 = vmax.f32 %v1419, 0.0
    %v1426 = vmax.f32 %v1420, 0.0
    %v1427 = vmax.f32 %v1421, 0.0
    %1428 = vst.msk [vmem:[#allocation11] sm:$0xff] %vm133, %v1422
    %1429 = vst.msk [vmem:[#allocation11 + $0x8] sm:$0xff] %vm133, %v1423
    %1430 = vst.msk [vmem:[#allocation11 + $0x10] sm:$0xff] %vm133, %v1424
    %1431 = vst.msk [vmem:[#allocation11 + $0x18] sm:$0xff] %vm133, %v1425
    %1432 = vst.msk [vmem:[#allocation11 + $0x20] sm:$0xff] %vm133, %v1426
    %1433 = vst.msk [vmem:[#allocation11 + $0x28] sm:$0xff] %vm133, %v1427
    // Predicated region
    $region42: #{tpu_custom_call.1} parent=1 // pred_check
      _
    $region43: #{tpu_custom_call.1} parent=1 // pred_check_branch
      %1435 = sbr.rel (0) target = $region45
    $region44: #{tpu_custom_call.1} parent=1 // pred_region
      %s1437 = ssub.s32 768, 768
      %1438 = vsyncadd [#allocation4], %s1437
      %s1439 = sshll.u32 [#allocation11], 4
      %s1440 = int_to_ptr.vmem [resolvable:$true] %s1439
      %1445 = dma.vmem_to_hbm [thread:$0]  %s1440, 768, %s5, [#allocation4], 128, 128, 8
    $region45: #{tpu_custom_call.1} parent=1 // pred_fallthru
      _
    // Predicated region
    $region46: #{tpu_custom_call.1} parent=1 // pred_check
      _
    $region47: #{tpu_custom_call.1} parent=1 // pred_check_branch
      %1447 = sbr.rel (0) target = $region49
    $region48: #{tpu_custom_call.1} parent=1 // pred_region
      %1448 = dma.done [#allocation4], 768
    $region49: #{tpu_custom_call.1} parent=1 // pred_fallthru
      _
    %1449 = vsyncpa [#allocation3], 1
    %1450 = vsyncpa [#allocation6], 1
    %1451 = vsyncpa [#allocation9], 1
    %1452 = vsyncpa [#allocation4], 1

</llo_original>
